<compile_context>
chip_gen: v6e
topology: v6e:2x2x1
jax: 0.10.0
libtpu: 0.0.40
codegen_flags: <defaults>
</compile_context>

<pallas_src>
import jax
import jax.numpy as jnp
from jax.experimental import pallas as pl
from jax.experimental.pallas import tpu as pltpu


# ---------------------------------------------------------------------------
# Fused kernel: all conv+relu+pool layers AND the final Linear in one body.
# ---------------------------------------------------------------------------
def _encoder_kernel_factory(b_tile, seq_len, n_layers):
    """Build the fused encoder kernel for a fixed (static) layer structure."""

    def kernel(*refs):
        x_ref = refs[0]                                   # (b_tile*seq_len, C0) f32
        conv_refs = refs[1:1 + 2 * n_layers]              # (w (3,Cin,Cout) bf16, b (1,Cout) f32)
        fcw_ref = refs[1 + 2 * n_layers]                  # (L_last, C_last, latent) bf16
        fcb_ref = refs[2 + 2 * n_layers]                  # (1, latent) f32
        out_ref = refs[3 + 2 * n_layers]                  # (b_tile, latent)
        scr = refs[4 + 2 * n_layers]                      # (b_tile*seq_len, C_max) f32, reused

        h = x_ref[...]                                    # (rows, C_in), rows are batch-major
        L = seq_len
        for i in range(n_layers):
            w_ref = conv_refs[2 * i]
            b_ref = conv_refs[2 * i + 1]
            rows = b_tile * L
            c_out = w_ref.shape[2]

            # k=3 taps as rolled copies (XLU slot) + masks: kills both the conv's
            # zero padding at sequence ends and the roll wrap-around, so nothing
            # leaks across batch boundaries.
            pos = jax.lax.broadcasted_iota(jnp.int32, (rows, 1), 0) % L
            x_prev = jnp.where(pos == 0, 0.0, pltpu.roll(h, 1, axis=0))             # h[l-1]
            x_next = jnp.where(pos == L - 1, 0.0, pltpu.roll(h, rows - 1, axis=0))  # h[l+1]

            # Three accumulating MXU dots (bf16 operands, f32 accumulation) --
            # no 3x-wide lane-concat temporary.
            acc = jnp.dot(h.astype(jnp.bfloat16), w_ref[1],
                          preferred_element_type=jnp.float32)
            acc = acc + jnp.dot(x_prev.astype(jnp.bfloat16), w_ref[0],
                                preferred_element_type=jnp.float32)
            acc = acc + jnp.dot(x_next.astype(jnp.bfloat16), w_ref[2],
                                preferred_element_type=jnp.float32)
            y = jnp.maximum(acc + b_ref[...], 0.0)        # bias + ReLU, f32

            # MaxPool1d(kernel=2, stride=2): pair-max via roll, then keep the even
            # rows with a single strided read from the reused scratch.
            ym = jnp.maximum(y, pltpu.roll(y, rows - 1, axis=0))   # ym[r]=max(y[r],y[r+1])
            scr[0:rows, 0:c_out] = ym
            L = L // 2
            if i + 1 < n_layers:
                h = scr[pl.ds(0, b_tile * L, 2), 0:c_out]          # even rows only

        # Flatten + Linear as L_last accumulated thin matmuls.  The pooled rows of
        # the last layer sit at even rows of `scr`, so the strided gather reads them
        # directly; the (b_tile, L_last*C_last) flat vector is never materialized.
        L_last, c_last, latent = fcw_ref.shape
        L_pre = 2 * L_last                                 # pre-pool rows per sequence
        fc_acc = jnp.zeros((b_tile, latent), jnp.float32)
        for l in range(L_last):
            x_l = scr[pl.ds(2 * l, b_tile, L_pre), 0:c_last]       # (b_tile, c_last)
            fc_acc = fc_acc + jnp.dot(x_l.astype(jnp.bfloat16), fcw_ref[l],
                                      preferred_element_type=jnp.float32)
        out_ref[...] = (fc_acc + fcb_ref[...]).astype(out_ref.dtype)

    return kernel


# ---------------------------------------------------------------------------
# Forward wrapper (single pallas_call, batch-tiled grid)
# ---------------------------------------------------------------------------
def _pick_b_tile(batch, seq_len, row_budget=2048):
    """Largest batch tile with sublane-aligned row counts that keeps the
    (b_tile*seq_len, C) slab modest; falls back to the full batch."""
    if batch < 8 or batch * seq_len <= row_budget:
        return batch
    cands = [d for d in range(8, batch + 1, 8)
             if batch % d == 0 and d * seq_len <= row_budget]
    return max(cands) if cands else batch


def ae_encoder_fwd(x, prepped, *, b_tile=None):
    """x: (B, seq_len, n_channels) -- same tensor the torch module receives.
    prepped: output of prepare_params() (kernel-layout, bf16 weights)."""
    B, L0, C0 = x.shape
    conv = prepped["conv"]
    fcw, fcb = prepped["fc_w"], prepped["fc_b"]
    n_layers = len(conv)
    L_last, c_last, latent = fcw.shape
    assert L_last * (2 ** n_layers) == L0, "seq_len must stay even through every MaxPool1d(2)"

    if b_tile is None:
        b_tile = _pick_b_tile(B, L0)
    assert B % b_tile == 0, "batch must be divisible by the batch tile"
    assert b_tile == B or b_tile % 8 == 0, "batch tile must be 8-aligned or the full batch"

    x2d = x.reshape(B * L0, C0)                      # free row-major reshape in XLA

    inputs = [x2d]
    for (w, b) in conv:
        inputs += [w, b]
    inputs += [fcw, fcb]

    # Activation slab tiled over the batch; weights resident (constant block index).
    in_specs = [pl.BlockSpec((b_tile * L0, C0), lambda i: (i, 0))]
    for (w, b) in conv:
        in_specs.append(pl.BlockSpec(w.shape, lambda i: (0, 0, 0)))
        in_specs.append(pl.BlockSpec(b.shape, lambda i: (0, 0)))
    in_specs.append(pl.BlockSpec(fcw.shape, lambda i: (0, 0, 0)))
    in_specs.append(pl.BlockSpec(fcb.shape, lambda i: (0, 0)))

    # ONE reusable scratch: max pre-pool activation size across layers.
    c_max = max(w.shape[2] for (w, _) in conv)
    scratch = [pltpu.VMEM((b_tile * L0, c_max), jnp.float32)]

    # Explicit VMEM budget: double-buffered x/out blocks + resident weights + scratch,
    # with headroom for live values; capped at 64 MiB so it is also v7x-safe.
    weight_bytes = sum(int(a.size) * a.dtype.itemsize for a in inputs[1:])
    est = (2 * b_tile * L0 * C0 * 4 + 2 * b_tile * latent * 4
           + 2 * weight_bytes + b_tile * L0 * c_max * 4)
    vmem_limit = int(min(64 * 2 ** 20, max(16 * 2 ** 20, 8 * est)))

    kernel = _encoder_kernel_factory(b_tile, L0, n_layers)

    return pl.pallas_call(
        kernel,
        out_shape=jax.ShapeDtypeStruct((B, latent), x.dtype),
        grid_spec=pltpu.PrefetchScalarGridSpec(
            num_scalar_prefetch=0,
            grid=(B // b_tile,),
            in_specs=in_specs,
            out_specs=pl.BlockSpec((b_tile, latent), lambda i: (i, 0)),
            scratch_shapes=scratch),
        compiler_params=pltpu.CompilerParams(
            dimension_semantics=("parallel",),          # megacore-shardable batch axis
            vmem_limit_bytes=vmem_limit),
    )(*inputs)


# ---------------------------------------------------------------------------
# One-time param preparation (hoisted out of the forward path)
# ---------------------------------------------------------------------------
def prepare_params(params, seq_len):
    """Torch-layout params -> kernel-layout params (bf16 matmul operands)."""
    conv_prepped = []
    L = seq_len
    for (w, b) in params["conv"]:                 # w: (C_out, C_in, 3) torch layout
        assert L % 2 == 0, "intermediate length must be even for MaxPool1d(2)"
        # taps-first layout: w_taps[k, c_in, c_out]; tap 0 multiplies x[l-1].
        w_taps = jnp.transpose(w, (2, 1, 0)).astype(jnp.bfloat16)
        conv_prepped.append((w_taps, b[None, :].astype(jnp.float32)))
        L //= 2
    c_last = params["conv"][-1][0].shape[0]
    latent = params["fc_w"].shape[0]
    # torch flatten of (B, C, L) is channel-major (c*L + l); kernel gathers length-major,
    # so reorder fc weight to (l, c, latent) once here.
    fw = params["fc_w"].reshape(latent, c_last, L)        # fw[j, c, l] = fc_w[j, c*L + l]
    fw = jnp.transpose(fw, (2, 1, 0))                     # (L_last, C_last, latent)
    return {"conv": conv_prepped,
            "fc_w": fw.astype(jnp.bfloat16),
            "fc_b": params["fc_b"][None, :].astype(jnp.float32)}


# ---------------------------------------------------------------------------
# Pure-JAX reference with exact PyTorch semantics (sanity check, f32 weights)
# ---------------------------------------------------------------------------
def ref_ae_encoder(x, params):
    h = jnp.transpose(x, (0, 2, 1))               # (B, C, L), like x.permute(0,2,1)
    for (w, b) in params["conv"]:
        y = jax.lax.conv_general_dilated(
            h, w, window_strides=(1,), padding=((1, 1),),
            dimension_numbers=("NCH", "OIH", "NCH"))
        y = jax.nn.relu(y + b[None, :, None])
        h = jnp.maximum(y[:, :, 0::2], y[:, :, 1::2])     # MaxPool1d(2)
    flat = h.reshape(h.shape[0], -1)                      # channel-major flatten
    return flat @ params["fc_w"].T + params["fc_b"]


# ---------------------------------------------------------------------------
def init_params(key, n_channels, hidden_dims, latent_dim, enc_out_len):
    params = {"conv": []}
    in_c = n_channels
    for h in hidden_dims:
        key, k1, k2 = jax.random.split(key, 3)
        w = jax.random.normal(k1, (h, in_c, 3), jnp.float32) * 0.2
        b = jax.random.normal(k2, (h,), jnp.float32) * 0.1
        params["conv"].append((w, b))
        in_c = h
    key, k1, k2 = jax.random.split(key, 3)
    params["fc_w"] = jax.random.normal(
        k1, (latent_dim, in_c * enc_out_len), jnp.float32) * 0.1
    params["fc_b"] = jax.random.normal(k2, (latent_dim,), jnp.float32) * 0.1
    return params


if __name__ == "__main__":
    seq_len, n_channels = 16, 4
    hidden_dims = (8, 16)
    latent_dim = 32
    batch = 16                                     # small, but exercises the tiled grid

    enc_out_len = seq_len
    for _ in hidden_dims:
        enc_out_len //= 2                          # 16 -> 8 -> 4

    key = jax.random.PRNGKey(0)
    kx, kp = jax.random.split(key)
    x = jax.random.normal(kx, (batch, seq_len, n_channels), jnp.float32)
    params = init_params(kp, n_channels, hidden_dims, latent_dim, enc_out_len)
    prepped = prepare_params(params, seq_len)      # hoisted weight re-layout + bf16 cast

    fwd = jax.jit(ae_encoder_fwd, static_argnames=("b_tile",))
    latent = jax.block_until_ready(fwd(x, prepped, b_tile=8))   # grid=(2,), "parallel"
    ref = jax.block_until_ready(ref_ae_encoder(x, params))

    assert latent.shape == (batch, latent_dim)
    err = float(jnp.max(jnp.abs(latent - ref)))
    # Looser tolerance than the all-f32 version: MXU operands are bf16 (f32 accumulate).
    assert jnp.allclose(latent, ref, atol=1e-1, rtol=1e-1), f"max abs err {err}"
    print("KERNEL_OK")
</pallas_src>

<mosaic_0001>
module attributes {stable_mosaic.version = 11 : i64} {
  func.func @kernel(%arg0: i32, %arg1: memref<128x4xf32, #tpu.memory_space<vmem>>, %arg2: memref<3x4x8xbf16, #tpu.memory_space<vmem>>, %arg3: memref<1x8xf32, #tpu.memory_space<vmem>>, %arg4: memref<3x8x16xbf16, #tpu.memory_space<vmem>>, %arg5: memref<1x16xf32, #tpu.memory_space<vmem>>, %arg6: memref<4x16x32xbf16, #tpu.memory_space<vmem>>, %arg7: memref<1x32xf32, #tpu.memory_space<vmem>>, %arg8: memref<8x32xf32, #tpu.memory_space<vmem>>, %arg9: memref<128x16xf32, #tpu.memory_space<vmem>>) attributes {dimension_semantics = [#tpu.dimension_semantics<parallel>], iteration_bounds = array<i64: 2>, scalar_prefetch = 0 : i64, scratch_operands = 1 : i64, tpu.core_type = #tpu.core_type<tc>, window_params = [{transform_indices = @transform_0, window_bounds = array<i64: 128, 4>}, {pipeline_mode = #tpu.pipeline_mode<synchronous>, transform_indices = @transform_1, window_bounds = array<i64: 3, 4, 8>}, {pipeline_mode = #tpu.pipeline_mode<synchronous>, transform_indices = @transform_2, window_bounds = array<i64: 1, 8>}, {pipeline_mode = #tpu.pipeline_mode<synchronous>, transform_indices = @transform_3, window_bounds = array<i64: 3, 8, 16>}, {pipeline_mode = #tpu.pipeline_mode<synchronous>, transform_indices = @transform_4, window_bounds = array<i64: 1, 16>}, {pipeline_mode = #tpu.pipeline_mode<synchronous>, transform_indices = @transform_5, window_bounds = array<i64: 4, 16, 32>}, {pipeline_mode = #tpu.pipeline_mode<synchronous>, transform_indices = @transform_6, window_bounds = array<i64: 1, 32>}, {transform_indices = @transform_7, window_bounds = array<i64: 8, 32>}]} {
    %c0 = arith.constant 0 : index
    %c0_0 = arith.constant 0 : index
    %0 = vector.load %arg1[%c0, %c0_0] : memref<128x4xf32, #tpu.memory_space<vmem>>, vector<128x4xf32>
    %1 = tpu.iota {dimensions = array<i32: 0>} : vector<128x1xi32>
    %c16_i32 = arith.constant 16 : i32
    %c0_i32 = arith.constant 0 : i32
    %2 = arith.cmpi eq, %c16_i32, %c0_i32 : i32
    %c1_i32 = arith.constant 1 : i32
    %3 = arith.select %2, %c1_i32, %c16_i32 : i32
    %4 = vector.broadcast %3 : i32 to vector<128x1xi32>
    %5 = arith.remsi %1, %4 : vector<128x1xi32>
    %c0_i32_1 = arith.constant 0 : i32
    %6 = vector.broadcast %c0_i32_1 : i32 to vector<128x1xi32>
    %7 = arith.cmpi ne, %5, %6 : vector<128x1xi32>
    %c0_i32_2 = arith.constant 0 : i32
    %8 = vector.broadcast %c0_i32_2 : i32 to vector<128x1xi32>
    %9 = arith.cmpi slt, %5, %8 : vector<128x1xi32>
    %c0_i32_3 = arith.constant 0 : i32
    %10 = arith.cmpi slt, %3, %c0_i32_3 : i32
    %11 = vector.broadcast %10 : i1 to vector<128x1xi1>
    %12 = vector.broadcast %11 : vector<128x1xi1> to vector<128x1xi1>
    %13 = arith.xori %9, %12 : vector<128x1xi1>
    %14 = arith.andi %13, %7 : vector<128x1xi1>
    %15 = vector.broadcast %3 : i32 to vector<128x1xi32>
    %16 = arith.addi %5, %15 : vector<128x1xi32>
    %17 = arith.select %14, %16, %5 : vector<128x1xi1>, vector<128x1xi32>
    %c0_i32_4 = arith.constant 0 : i32
    %18 = vector.broadcast %c0_i32_4 : i32 to vector<128x1xi32>
    %19 = arith.cmpi eq, %17, %18 : vector<128x1xi32>
    %c1_i32_5 = arith.constant 1 : i32
    %20 = tpu.dynamic_rotate %0 by %c1_i32_5 dim 0 : vector<128x4xf32>, i32 -> vector<128x4xf32>
    %cst = arith.constant 0.000000e+00 : f32
    %21 = vector.shape_cast %19 : vector<128x1xi1> to vector<128x1xi1>
    %22 = vector.broadcast %21 : vector<128x1xi1> to vector<128x4xi1>
    %23 = vector.broadcast %cst : f32 to vector<128x4xf32>
    %24 = arith.select %22, %23, %20 : vector<128x4xi1>, vector<128x4xf32>
    %c15_i32 = arith.constant 15 : i32
    %25 = vector.broadcast %c15_i32 : i32 to vector<128x1xi32>
    %26 = arith.cmpi eq, %17, %25 : vector<128x1xi32>
    %c127_i32 = arith.constant 127 : i32
    %27 = tpu.dynamic_rotate %0 by %c127_i32 dim 0 : vector<128x4xf32>, i32 -> vector<128x4xf32>
    %cst_6 = arith.constant 0.000000e+00 : f32
    %28 = vector.shape_cast %26 : vector<128x1xi1> to vector<128x1xi1>
    %29 = vector.broadcast %28 : vector<128x1xi1> to vector<128x4xi1>
    %30 = vector.broadcast %cst_6 : f32 to vector<128x4xf32>
    %31 = arith.select %29, %30, %27 : vector<128x4xi1>, vector<128x4xf32>
    %32 = arith.truncf %0 : vector<128x4xf32> to vector<128x4xbf16>
    %c1 = arith.constant 1 : index
    %c0_7 = arith.constant 0 : index
    %c0_8 = arith.constant 0 : index
    %33 = vector.load %arg2[%c1, %c0_7, %c0_8] : memref<3x4x8xbf16, #tpu.memory_space<vmem>>, vector<1x4x8xbf16>
    %34 = vector.shape_cast %33 : vector<1x4x8xbf16> to vector<4x8xbf16>
    %cst_9 = arith.constant dense<0.000000e+00> : vector<128x8xf32>
    %35 = tpu.matmul %32, %34, %cst_9 {dimension_numbers = #tpu.dot_dimension_numbers<[1], [0], [0], [1], [0, 0, 1, 1], [], []>} : vector<128x4xbf16>, vector<4x8xbf16>, vector<128x8xf32> -> vector<128x8xf32>
    %36 = arith.truncf %24 : vector<128x4xf32> to vector<128x4xbf16>
    %c0_10 = arith.constant 0 : index
    %c0_11 = arith.constant 0 : index
    %c0_12 = arith.constant 0 : index
    %37 = vector.load %arg2[%c0_10, %c0_11, %c0_12] : memref<3x4x8xbf16, #tpu.memory_space<vmem>>, vector<1x4x8xbf16>
    %38 = vector.shape_cast %37 : vector<1x4x8xbf16> to vector<4x8xbf16>
    %cst_13 = arith.constant dense<0.000000e+00> : vector<128x8xf32>
    %39 = tpu.matmul %36, %38, %cst_13 {dimension_numbers = #tpu.dot_dimension_numbers<[1], [0], [0], [1], [0, 0, 1, 1], [], []>} : vector<128x4xbf16>, vector<4x8xbf16>, vector<128x8xf32> -> vector<128x8xf32>
    %40 = arith.addf %35, %39 : vector<128x8xf32>
    %41 = arith.truncf %31 : vector<128x4xf32> to vector<128x4xbf16>
    %c2 = arith.constant 2 : index
    %c0_14 = arith.constant 0 : index
    %c0_15 = arith.constant 0 : index
    %42 = vector.load %arg2[%c2, %c0_14, %c0_15] : memref<3x4x8xbf16, #tpu.memory_space<vmem>>, vector<1x4x8xbf16>
    %43 = vector.shape_cast %42 : vector<1x4x8xbf16> to vector<4x8xbf16>
    %cst_16 = arith.constant dense<0.000000e+00> : vector<128x8xf32>
    %44 = tpu.matmul %41, %43, %cst_16 {dimension_numbers = #tpu.dot_dimension_numbers<[1], [0], [0], [1], [0, 0, 1, 1], [], []>} : vector<128x4xbf16>, vector<4x8xbf16>, vector<128x8xf32> -> vector<128x8xf32>
    %45 = arith.addf %40, %44 : vector<128x8xf32>
    %c0_17 = arith.constant 0 : index
    %c0_18 = arith.constant 0 : index
    %46 = vector.load %arg3[%c0_17, %c0_18] : memref<1x8xf32, #tpu.memory_space<vmem>>, vector<1x8xf32>
    %47 = vector.broadcast %46 : vector<1x8xf32> to vector<128x8xf32>
    %48 = arith.addf %45, %47 : vector<128x8xf32>
    %cst_19 = arith.constant 0.000000e+00 : f32
    %49 = vector.broadcast %cst_19 : f32 to vector<128x8xf32>
    %50 = arith.maximumf %48, %49 : vector<128x8xf32>
    %c127_i32_20 = arith.constant 127 : i32
    %51 = tpu.dynamic_rotate %50 by %c127_i32_20 dim 0 : vector<128x8xf32>, i32 -> vector<128x8xf32>
    %52 = arith.maximumf %50, %51 : vector<128x8xf32>
    %c0_21 = arith.constant 0 : index
    %c0_22 = arith.constant 0 : index
    %53 = vector.load %arg9[%c0_21, %c0_22] : memref<128x16xf32, #tpu.memory_space<vmem>>, vector<128x8xf32>
    tpu.vector_store %arg9[%c0_21, %c0_22], %52 {strides = array<i32>} : memref<128x16xf32, #tpu.memory_space<vmem>>, vector<128x8xf32>,
    %c0_23 = arith.constant 0 : index
    %c0_24 = arith.constant 0 : index
    %54 = tpu.strided_load %arg9[%c0_23, %c0_24] {strides = array<i32: 2, 1>} : memref<128x16xf32, #tpu.memory_space<vmem>>, vector<64x8xf32>
    %55 = tpu.iota {dimensions = array<i32: 0>} : vector<64x1xi32>
    %c8_i32 = arith.constant 8 : i32
    %c0_i32_25 = arith.constant 0 : i32
    %56 = arith.cmpi eq, %c8_i32, %c0_i32_25 : i32
    %c1_i32_26 = arith.constant 1 : i32
    %57 = arith.select %56, %c1_i32_26, %c8_i32 : i32
    %58 = vector.broadcast %57 : i32 to vector<64x1xi32>
    %59 = arith.remsi %55, %58 : vector<64x1xi32>
    %c0_i32_27 = arith.constant 0 : i32
    %60 = vector.broadcast %c0_i32_27 : i32 to vector<64x1xi32>
    %61 = arith.cmpi ne, %59, %60 : vector<64x1xi32>
    %c0_i32_28 = arith.constant 0 : i32
    %62 = vector.broadcast %c0_i32_28 : i32 to vector<64x1xi32>
    %63 = arith.cmpi slt, %59, %62 : vector<64x1xi32>
    %c0_i32_29 = arith.constant 0 : i32
    %64 = arith.cmpi slt, %57, %c0_i32_29 : i32
    %65 = vector.broadcast %64 : i1 to vector<64x1xi1>
    %66 = vector.broadcast %65 : vector<64x1xi1> to vector<64x1xi1>
    %67 = arith.xori %63, %66 : vector<64x1xi1>
    %68 = arith.andi %67, %61 : vector<64x1xi1>
    %69 = vector.broadcast %57 : i32 to vector<64x1xi32>
    %70 = arith.addi %59, %69 : vector<64x1xi32>
    %71 = arith.select %68, %70, %59 : vector<64x1xi1>, vector<64x1xi32>
    %c0_i32_30 = arith.constant 0 : i32
    %72 = vector.broadcast %c0_i32_30 : i32 to vector<64x1xi32>
    %73 = arith.cmpi eq, %71, %72 : vector<64x1xi32>
    %c1_i32_31 = arith.constant 1 : i32
    %74 = tpu.dynamic_rotate %54 by %c1_i32_31 dim 0 : vector<64x8xf32>, i32 -> vector<64x8xf32>
    %cst_32 = arith.constant 0.000000e+00 : f32
    %75 = vector.shape_cast %73 : vector<64x1xi1> to vector<64x1xi1>
    %76 = vector.broadcast %75 : vector<64x1xi1> to vector<64x8xi1>
    %77 = vector.broadcast %cst_32 : f32 to vector<64x8xf32>
    %78 = arith.select %76, %77, %74 : vector<64x8xi1>, vector<64x8xf32>
    %c7_i32 = arith.constant 7 : i32
    %79 = vector.broadcast %c7_i32 : i32 to vector<64x1xi32>
    %80 = arith.cmpi eq, %71, %79 : vector<64x1xi32>
    %c63_i32 = arith.constant 63 : i32
    %81 = tpu.dynamic_rotate %54 by %c63_i32 dim 0 : vector<64x8xf32>, i32 -> vector<64x8xf32>
    %cst_33 = arith.constant 0.000000e+00 : f32
    %82 = vector.shape_cast %80 : vector<64x1xi1> to vector<64x1xi1>
    %83 = vector.broadcast %82 : vector<64x1xi1> to vector<64x8xi1>
    %84 = vector.broadcast %cst_33 : f32 to vector<64x8xf32>
    %85 = arith.select %83, %84, %81 : vector<64x8xi1>, vector<64x8xf32>
    %86 = arith.truncf %54 : vector<64x8xf32> to vector<64x8xbf16>
    %c1_34 = arith.constant 1 : index
    %c0_35 = arith.constant 0 : index
    %c0_36 = arith.constant 0 : index
    %87 = vector.load %arg4[%c1_34, %c0_35, %c0_36] : memref<3x8x16xbf16, #tpu.memory_space<vmem>>, vector<1x8x16xbf16>
    %88 = vector.shape_cast %87 : vector<1x8x16xbf16> to vector<8x16xbf16>
    %cst_37 = arith.constant dense<0.000000e+00> : vector<64x16xf32>
    %89 = tpu.matmul %86, %88, %cst_37 {dimension_numbers = #tpu.dot_dimension_numbers<[1], [0], [0], [1], [0, 0, 1, 1], [], []>} : vector<64x8xbf16>, vector<8x16xbf16>, vector<64x16xf32> -> vector<64x16xf32>
    %90 = arith.truncf %78 : vector<64x8xf32> to vector<64x8xbf16>
    %c0_38 = arith.constant 0 : index
    %c0_39 = arith.constant 0 : index
    %c0_40 = arith.constant 0 : index
    %91 = vector.load %arg4[%c0_38, %c0_39, %c0_40] : memref<3x8x16xbf16, #tpu.memory_space<vmem>>, vector<1x8x16xbf16>
    %92 = vector.shape_cast %91 : vector<1x8x16xbf16> to vector<8x16xbf16>
    %cst_41 = arith.constant dense<0.000000e+00> : vector<64x16xf32>
    %93 = tpu.matmul %90, %92, %cst_41 {dimension_numbers = #tpu.dot_dimension_numbers<[1], [0], [0], [1], [0, 0, 1, 1], [], []>} : vector<64x8xbf16>, vector<8x16xbf16>, vector<64x16xf32> -> vector<64x16xf32>
    %94 = arith.addf %89, %93 : vector<64x16xf32>
    %95 = arith.truncf %85 : vector<64x8xf32> to vector<64x8xbf16>
    %c2_42 = arith.constant 2 : index
    %c0_43 = arith.constant 0 : index
    %c0_44 = arith.constant 0 : index
    %96 = vector.load %arg4[%c2_42, %c0_43, %c0_44] : memref<3x8x16xbf16, #tpu.memory_space<vmem>>, vector<1x8x16xbf16>
    %97 = vector.shape_cast %96 : vector<1x8x16xbf16> to vector<8x16xbf16>
    %cst_45 = arith.constant dense<0.000000e+00> : vector<64x16xf32>
    %98 = tpu.matmul %95, %97, %cst_45 {dimension_numbers = #tpu.dot_dimension_numbers<[1], [0], [0], [1], [0, 0, 1, 1], [], []>} : vector<64x8xbf16>, vector<8x16xbf16>, vector<64x16xf32> -> vector<64x16xf32>
    %99 = arith.addf %94, %98 : vector<64x16xf32>
    %c0_46 = arith.constant 0 : index
    %c0_47 = arith.constant 0 : index
    %100 = vector.load %arg5[%c0_46, %c0_47] : memref<1x16xf32, #tpu.memory_space<vmem>>, vector<1x16xf32>
    %101 = vector.broadcast %100 : vector<1x16xf32> to vector<64x16xf32>
    %102 = arith.addf %99, %101 : vector<64x16xf32>
    %cst_48 = arith.constant 0.000000e+00 : f32
    %103 = vector.broadcast %cst_48 : f32 to vector<64x16xf32>
    %104 = arith.maximumf %102, %103 : vector<64x16xf32>
    %c63_i32_49 = arith.constant 63 : i32
    %105 = tpu.dynamic_rotate %104 by %c63_i32_49 dim 0 : vector<64x16xf32>, i32 -> vector<64x16xf32>
    %106 = arith.maximumf %104, %105 : vector<64x16xf32>
    %c0_50 = arith.constant 0 : index
    %c0_51 = arith.constant 0 : index
    %107 = vector.load %arg9[%c0_50, %c0_51] : memref<128x16xf32, #tpu.memory_space<vmem>>, vector<64x16xf32>
    tpu.vector_store %arg9[%c0_50, %c0_51], %106 {strides = array<i32>} : memref<128x16xf32, #tpu.memory_space<vmem>>, vector<64x16xf32>,
    %cst_52 = arith.constant 0.000000e+00 : f32
    %108 = vector.broadcast %cst_52 : f32 to vector<8x32xf32>
    %c0_53 = arith.constant 0 : index
    %c0_54 = arith.constant 0 : index
    %109 = tpu.strided_load %arg9[%c0_53, %c0_54] {strides = array<i32: 8, 1>} : memref<128x16xf32, #tpu.memory_space<vmem>>, vector<8x16xf32>
    %110 = arith.truncf %109 : vector<8x16xf32> to vector<8x16xbf16>
    %c0_55 = arith.constant 0 : index
    %c0_56 = arith.constant 0 : index
    %c0_57 = arith.constant 0 : index
    %111 = vector.load %arg6[%c0_55, %c0_56, %c0_57] : memref<4x16x32xbf16, #tpu.memory_space<vmem>>, vector<1x16x32xbf16>
    %112 = vector.shape_cast %111 : vector<1x16x32xbf16> to vector<16x32xbf16>
    %cst_58 = arith.constant dense<0.000000e+00> : vector<8x32xf32>
    %113 = tpu.matmul %110, %112, %cst_58 {dimension_numbers = #tpu.dot_dimension_numbers<[1], [0], [0], [1], [0, 0, 1, 1], [], []>} : vector<8x16xbf16>, vector<16x32xbf16>, vector<8x32xf32> -> vector<8x32xf32>
    %114 = arith.addf %108, %113 : vector<8x32xf32>
    %c2_59 = arith.constant 2 : index
    %c0_60 = arith.constant 0 : index
    %115 = tpu.strided_load %arg9[%c2_59, %c0_60] {strides = array<i32: 8, 1>} : memref<128x16xf32, #tpu.memory_space<vmem>>, vector<8x16xf32>
    %116 = arith.truncf %115 : vector<8x16xf32> to vector<8x16xbf16>
    %c1_61 = arith.constant 1 : index
    %c0_62 = arith.constant 0 : index
    %c0_63 = arith.constant 0 : index
    %117 = vector.load %arg6[%c1_61, %c0_62, %c0_63] : memref<4x16x32xbf16, #tpu.memory_space<vmem>>, vector<1x16x32xbf16>
    %118 = vector.shape_cast %117 : vector<1x16x32xbf16> to vector<16x32xbf16>
    %cst_64 = arith.constant dense<0.000000e+00> : vector<8x32xf32>
    %119 = tpu.matmul %116, %118, %cst_64 {dimension_numbers = #tpu.dot_dimension_numbers<[1], [0], [0], [1], [0, 0, 1, 1], [], []>} : vector<8x16xbf16>, vector<16x32xbf16>, vector<8x32xf32> -> vector<8x32xf32>
    %120 = arith.addf %114, %119 : vector<8x32xf32>
    %c4 = arith.constant 4 : index
    %c0_65 = arith.constant 0 : index
    %121 = tpu.strided_load %arg9[%c4, %c0_65] {strides = array<i32: 8, 1>} : memref<128x16xf32, #tpu.memory_space<vmem>>, vector<8x16xf32>
    %122 = arith.truncf %121 : vector<8x16xf32> to vector<8x16xbf16>
    %c2_66 = arith.constant 2 : index
    %c0_67 = arith.constant 0 : index
    %c0_68 = arith.constant 0 : index
    %123 = vector.load %arg6[%c2_66, %c0_67, %c0_68] : memref<4x16x32xbf16, #tpu.memory_space<vmem>>, vector<1x16x32xbf16>
    %124 = vector.shape_cast %123 : vector<1x16x32xbf16> to vector<16x32xbf16>
    %cst_69 = arith.constant dense<0.000000e+00> : vector<8x32xf32>
    %125 = tpu.matmul %122, %124, %cst_69 {dimension_numbers = #tpu.dot_dimension_numbers<[1], [0], [0], [1], [0, 0, 1, 1], [], []>} : vector<8x16xbf16>, vector<16x32xbf16>, vector<8x32xf32> -> vector<8x32xf32>
    %126 = arith.addf %120, %125 : vector<8x32xf32>
    %c6 = arith.constant 6 : index
    %c0_70 = arith.constant 0 : index
    %127 = tpu.strided_load %arg9[%c6, %c0_70] {strides = array<i32: 8, 1>} : memref<128x16xf32, #tpu.memory_space<vmem>>, vector<8x16xf32>
    %128 = arith.truncf %127 : vector<8x16xf32> to vector<8x16xbf16>
    %c3 = arith.constant 3 : index
    %c0_71 = arith.constant 0 : index
    %c0_72 = arith.constant 0 : index
    %129 = vector.load %arg6[%c3, %c0_71, %c0_72] : memref<4x16x32xbf16, #tpu.memory_space<vmem>>, vector<1x16x32xbf16>
    %130 = vector.shape_cast %129 : vector<1x16x32xbf16> to vector<16x32xbf16>
    %cst_73 = arith.constant dense<0.000000e+00> : vector<8x32xf32>
    %131 = tpu.matmul %128, %130, %cst_73 {dimension_numbers = #tpu.dot_dimension_numbers<[1], [0], [0], [1], [0, 0, 1, 1], [], []>} : vector<8x16xbf16>, vector<16x32xbf16>, vector<8x32xf32> -> vector<8x32xf32>
    %132 = arith.addf %126, %131 : vector<8x32xf32>
    %c0_74 = arith.constant 0 : index
    %c0_75 = arith.constant 0 : index
    %133 = vector.load %arg7[%c0_74, %c0_75] : memref<1x32xf32, #tpu.memory_space<vmem>>, vector<1x32xf32>
    %134 = vector.broadcast %133 : vector<1x32xf32> to vector<8x32xf32>
    %135 = arith.addf %132, %134 : vector<8x32xf32>
    %c0_76 = arith.constant 0 : index
    %c0_77 = arith.constant 0 : index
    %136 = vector.load %arg8[%c0_76, %c0_77] : memref<8x32xf32, #tpu.memory_space<vmem>>, vector<8x32xf32>
    tpu.vector_store %arg8[%c0_76, %c0_77], %135 {strides = array<i32>} : memref<8x32xf32, #tpu.memory_space<vmem>>, vector<8x32xf32>,
    return
  }
  func.func @transform_0(%arg0: i32) -> (i32, i32) {
    %c0_i32 = arith.constant 0 : i32
    %c0_i32_0 = arith.constant 0 : i32
    return %arg0, %c0_i32 : i32, i32
  }
  func.func @transform_1(%arg0: i32) -> (i32, i32, i32) {
    %c0_i32 = arith.constant 0 : i32
    %c0_i32_0 = arith.constant 0 : i32
    %c0_i32_1 = arith.constant 0 : i32
    %c0_i32_2 = arith.constant 0 : i32
    return %c0_i32, %c0_i32_0, %c0_i32_1 : i32, i32, i32
  }
  func.func @transform_2(%arg0: i32) -> (i32, i32) {
    %c0_i32 = arith.constant 0 : i32
    %c0_i32_0 = arith.constant 0 : i32
    %c0_i32_1 = arith.constant 0 : i32
    return %c0_i32, %c0_i32_0 : i32, i32
  }
  func.func @transform_3(%arg0: i32) -> (i32, i32, i32) {
    %c0_i32 = arith.constant 0 : i32
    %c0_i32_0 = arith.constant 0 : i32
    %c0_i32_1 = arith.constant 0 : i32
    %c0_i32_2 = arith.constant 0 : i32
    return %c0_i32, %c0_i32_0, %c0_i32_1 : i32, i32, i32
  }
  func.func @transform_4(%arg0: i32) -> (i32, i32) {
    %c0_i32 = arith.constant 0 : i32
    %c0_i32_0 = arith.constant 0 : i32
    %c0_i32_1 = arith.constant 0 : i32
    return %c0_i32, %c0_i32_0 : i32, i32
  }
  func.func @transform_5(%arg0: i32) -> (i32, i32, i32) {
    %c0_i32 = arith.constant 0 : i32
    %c0_i32_0 = arith.constant 0 : i32
    %c0_i32_1 = arith.constant 0 : i32
    %c0_i32_2 = arith.constant 0 : i32
    return %c0_i32, %c0_i32_0, %c0_i32_1 : i32, i32, i32
  }
  func.func @transform_6(%arg0: i32) -> (i32, i32) {
    %c0_i32 = arith.constant 0 : i32
    %c0_i32_0 = arith.constant 0 : i32
    %c0_i32_1 = arith.constant 0 : i32
    return %c0_i32, %c0_i32_0 : i32, i32
  }
  func.func @transform_7(%arg0: i32) -> (i32, i32) {
    %c0_i32 = arith.constant 0 : i32
    %c0_i32_0 = arith.constant 0 : i32
    return %arg0, %c0_i32 : i32, i32
  }
}

</mosaic_0001>

<llo_original>
// kernel: ae_encoder_fwd.1
$region0: #{ae_encoder_fwd.1}
  #allocation0 [shape = 'u32[]', space=smem, size = 0x4, offset = 0x4, fixed_abs, tag = 'smem constant byte address 0x4 - core index']
  #allocation1 [shape = 'u32[144,128]{1,0:T(1,128)}', space=vmem, size = 0x12000, scoped, tag = 'internal scratch']
  #allocation2 [shape = 'f32[128,16]{1,0:T(8,128)}', space=vmem, size = 0x10000, scoped, tag = 'scratch operand']
  %s0 = inlined_call_operand.vmem [shape: f32[256,4], index: 0, kind: input, shape index: {}]
  %s1 = inlined_call_operand.vmem [shape: bf16[3,4,8], index: 1, kind: input, shape index: {}]
  %s2 = inlined_call_operand.vmem [shape: f32[1,8], index: 2, kind: input, shape index: {}]
  %s3 = inlined_call_operand.vmem [shape: bf16[3,8,16], index: 3, kind: input, shape index: {}]
  %s4 = inlined_call_operand.vmem [shape: f32[1,16], index: 4, kind: input, shape index: {}]
  %s5 = inlined_call_operand.vmem [shape: bf16[4,16,32], index: 5, kind: input, shape index: {}]
  %s6 = inlined_call_operand.vmem [shape: f32[1,32], index: 6, kind: input, shape index: {}]
  %s7 = inlined_call_operand.hbm [shape: f32[16,32], index: 7, kind: output, shape index: {}]
  %s8 = sld [smem:[#allocation0]]
  $region61: #{ae_encoder_fwd.1} parent=0
    _
  %s10 = ssub.s32 1, %s8
  %s11 = scalar_select 0, %s10, %s8
  $region1: #{ae_encoder_fwd.1} parent=0
    #allocation3 [shape = 'u8[8192]{0}', space=vmem, size = 0x2000, scoped, tag = 'output window, operand 0']
    #allocation4 [shape = 's32[2]{0}', space=sflag, size = 0x8, scoped, tag = 'scoped memory for ae_encoder_fwd.1']
    %12 = vsyncpa [#allocation4], 0
    %s13 = scalar_lea.sflag [#allocation4], 1
    %14 = vsyncpa %s13, 0
    loop: start=0, step=1, limit=4
    $region2: #{ae_encoder_fwd.1} parent=1 // loop_pre_header
      _
    $region3: #{ae_encoder_fwd.1} parent=1 // loop_header
      %s16 = sphi 0, %s20
      %p17 = scmp.ge.s32.totalorder %s16, 4
      %s26 = sphi 0, %s28
      %s29 = sphi 0, %s26
      %s30 = sphi 0, %s29
      %s46 = sphi 0, %s30
      %s50 = sphi 0, %s50
      %s52 = sphi 0, %s50
      %s53 = sphi 0, %s52
      %s67 = sphi 0, %s53
      %s71 = sphi 0, %s71
      %s73 = sphi 0, %s71
      %s74 = sphi 0, %s73
      %s88 = sphi 0, %s74
      %s92 = sphi 0, %s92
      %s94 = sphi 0, %s92
      %s95 = sphi 0, %s94
      %s109 = sphi 0, %s95
      %s113 = sphi 0, %s113
      %s115 = sphi 0, %s113
      %s116 = sphi 0, %s115
      %s130 = sphi 0, %s116
      %s134 = sphi 0, %s134
      %s136 = sphi 0, %s134
      %s137 = sphi 0, %s136
      %s151 = sphi 0, %s137
      %s155 = sphi 0, %s155
      %s157 = sphi 0, %s155
      %s158 = sphi 0, %s157
      %s172 = sphi 0, %s158
      %s178 = sphi 0, %s180
      %s181 = sphi 0, %s178
      %s182 = sphi 0, %s181
      %s198 = sphi 0, %s182
    $region4: #{ae_encoder_fwd.1} parent=1 // loop_header_branch
      %19 = sbr.rel (%p17) target = $region8
    $region5: #{ae_encoder_fwd.1} parent=1 // loop_body
      %s21 = ssub.s32 %s16, 1
      %s22 = ssub.s32 %s16, 2
      %s23 = sadd.s32 %s16, 1
      %s24 = ssub.s32 %s16, %s23
      %p25 = scmp.eq.s32.totalorder %s24, 0
      %s27 = sadd.s32 %s26, 1
      %s28 = scalar_select %p25, %s26, %s27
      %p31 = pneg %p25
      %p32 = scmp.eq.s32.totalorder %s16, 1
      %p33 = por %p31, %p32
      %p34 = scmp.ne.s32.totalorder %s26, %s29
      %p35 = scmp.eq.s32.totalorder %s16, 0
      %p36 = por %p34, %p35
      %p37 = scmp.ne.s32.totalorder %s26, %s29
      %p38 = scmp.eq.s32.totalorder %s21, 1
      %p39 = por %p37, %p38
      %p40 = scmp.ne.s32.totalorder %s29, %s30
      %p41 = scmp.eq.s32.totalorder %s21, 0
      %p42 = por %p40, %p41
      %p43 = scmp.ne.s32.totalorder %s29, %s30
      %p44 = scmp.eq.s32.totalorder %s22, 1
      %p45 = por %p43, %p44
      %p47 = scmp.ne.s32.totalorder %s30, %s46
      %p48 = scmp.eq.s32.totalorder %s22, 0
      %p49 = por %p47, %p48
      %s51 = sadd.s32 %s50, 1
      %p54 = scmp.eq.s32.totalorder %s16, 1
      %p55 = scmp.ne.s32.totalorder %s50, %s52
      %p56 = scmp.eq.s32.totalorder %s16, 0
      %p57 = por %p55, %p56
      %p58 = scmp.ne.s32.totalorder %s50, %s52
      %p59 = scmp.eq.s32.totalorder %s21, 1
      %p60 = por %p58, %p59
      %p61 = scmp.ne.s32.totalorder %s52, %s53
      %p62 = scmp.eq.s32.totalorder %s21, 0
      %p63 = por %p61, %p62
      %p64 = scmp.ne.s32.totalorder %s52, %s53
      %p65 = scmp.eq.s32.totalorder %s22, 1
      %p66 = por %p64, %p65
      %p68 = scmp.ne.s32.totalorder %s53, %s67
      %p69 = scmp.eq.s32.totalorder %s22, 0
      %p70 = por %p68, %p69
      %s72 = sadd.s32 %s71, 1
      %p75 = scmp.eq.s32.totalorder %s16, 1
      %p76 = scmp.ne.s32.totalorder %s71, %s73
      %p77 = scmp.eq.s32.totalorder %s16, 0
      %p78 = por %p76, %p77
      %p79 = scmp.ne.s32.totalorder %s71, %s73
      %p80 = scmp.eq.s32.totalorder %s21, 1
      %p81 = por %p79, %p80
      %p82 = scmp.ne.s32.totalorder %s73, %s74
      %p83 = scmp.eq.s32.totalorder %s21, 0
      %p84 = por %p82, %p83
      %p85 = scmp.ne.s32.totalorder %s73, %s74
      %p86 = scmp.eq.s32.totalorder %s22, 1
      %p87 = por %p85, %p86
      %p89 = scmp.ne.s32.totalorder %s74, %s88
      %p90 = scmp.eq.s32.totalorder %s22, 0
      %p91 = por %p89, %p90
      %s93 = sadd.s32 %s92, 1
      %p96 = scmp.eq.s32.totalorder %s16, 1
      %p97 = scmp.ne.s32.totalorder %s92, %s94
      %p98 = scmp.eq.s32.totalorder %s16, 0
      %p99 = por %p97, %p98
      %p100 = scmp.ne.s32.totalorder %s92, %s94
      %p101 = scmp.eq.s32.totalorder %s21, 1
      %p102 = por %p100, %p101
      %p103 = scmp.ne.s32.totalorder %s94, %s95
      %p104 = scmp.eq.s32.totalorder %s21, 0
      %p105 = por %p103, %p104
      %p106 = scmp.ne.s32.totalorder %s94, %s95
      %p107 = scmp.eq.s32.totalorder %s22, 1
      %p108 = por %p106, %p107
      %p110 = scmp.ne.s32.totalorder %s95, %s109
      %p111 = scmp.eq.s32.totalorder %s22, 0
      %p112 = por %p110, %p111
      %s114 = sadd.s32 %s113, 1
      %p117 = scmp.eq.s32.totalorder %s16, 1
      %p118 = scmp.ne.s32.totalorder %s113, %s115
      %p119 = scmp.eq.s32.totalorder %s16, 0
      %p120 = por %p118, %p119
      %p121 = scmp.ne.s32.totalorder %s113, %s115
      %p122 = scmp.eq.s32.totalorder %s21, 1
      %p123 = por %p121, %p122
      %p124 = scmp.ne.s32.totalorder %s115, %s116
      %p125 = scmp.eq.s32.totalorder %s21, 0
      %p126 = por %p124, %p125
      %p127 = scmp.ne.s32.totalorder %s115, %s116
      %p128 = scmp.eq.s32.totalorder %s22, 1
      %p129 = por %p127, %p128
      %p131 = scmp.ne.s32.totalorder %s116, %s130
      %p132 = scmp.eq.s32.totalorder %s22, 0
      %p133 = por %p131, %p132
      %s135 = sadd.s32 %s134, 1
      %p138 = scmp.eq.s32.totalorder %s16, 1
      %p139 = scmp.ne.s32.totalorder %s134, %s136
      %p140 = scmp.eq.s32.totalorder %s16, 0
      %p141 = por %p139, %p140
      %p142 = scmp.ne.s32.totalorder %s134, %s136
      %p143 = scmp.eq.s32.totalorder %s21, 1
      %p144 = por %p142, %p143
      %p145 = scmp.ne.s32.totalorder %s136, %s137
      %p146 = scmp.eq.s32.totalorder %s21, 0
      %p147 = por %p145, %p146
      %p148 = scmp.ne.s32.totalorder %s136, %s137
      %p149 = scmp.eq.s32.totalorder %s22, 1
      %p150 = por %p148, %p149
      %p152 = scmp.ne.s32.totalorder %s137, %s151
      %p153 = scmp.eq.s32.totalorder %s22, 0
      %p154 = por %p152, %p153
      %s156 = sadd.s32 %s155, 1
      %p159 = scmp.eq.s32.totalorder %s16, 1
      %p160 = scmp.ne.s32.totalorder %s155, %s157
      %p161 = scmp.eq.s32.totalorder %s16, 0
      %p162 = por %p160, %p161
      %p163 = scmp.ne.s32.totalorder %s155, %s157
      %p164 = scmp.eq.s32.totalorder %s21, 1
      %p165 = por %p163, %p164
      %p166 = scmp.ne.s32.totalorder %s157, %s158
      %p167 = scmp.eq.s32.totalorder %s21, 0
      %p168 = por %p166, %p167
      %p169 = scmp.ne.s32.totalorder %s157, %s158
      %p170 = scmp.eq.s32.totalorder %s22, 1
      %p171 = por %p169, %p170
      %p173 = scmp.ne.s32.totalorder %s158, %s172
      %p174 = scmp.eq.s32.totalorder %s22, 0
      %p175 = por %p173, %p174
      %s176 = ssub.s32 %s16, %s23
      %p177 = scmp.eq.s32.totalorder %s176, 0
      %s179 = sadd.s32 %s178, 1
      %s180 = scalar_select %p177, %s178, %s179
      %p183 = pneg %p177
      %p184 = scmp.eq.s32.totalorder %s16, 1
      %p185 = por %p183, %p184
      %p186 = scmp.ne.s32.totalorder %s178, %s181
      %p187 = scmp.eq.s32.totalorder %s16, 0
      %p188 = por %p186, %p187
      %p189 = scmp.ne.s32.totalorder %s178, %s181
      %p190 = scmp.eq.s32.totalorder %s21, 1
      %p191 = por %p189, %p190
      %p192 = scmp.ne.s32.totalorder %s181, %s182
      %p193 = scmp.eq.s32.totalorder %s21, 0
      %p194 = por %p192, %p193
      %p195 = scmp.ne.s32.totalorder %s181, %s182
      %p196 = scmp.eq.s32.totalorder %s22, 1
      %p197 = por %p195, %p196
      %p199 = scmp.ne.s32.totalorder %s182, %s198
      %p200 = scmp.eq.s32.totalorder %s22, 0
      %p201 = por %p199, %p200
      %p202 = scmp.le.s32.totalorder 1, %s16
      %p203 = scmp.lt.s32.totalorder %s16, 3
      %p204 = pnand %p202, %p203
      %p205 = pneg %p204
      // Predicated region
      $region9: #{ae_encoder_fwd.1} parent=5 // pred_check
        _
      $region10: #{ae_encoder_fwd.1} parent=5 // pred_check_branch
        %207 = sbr.rel (%p204) target = $region12
      $region11: #{ae_encoder_fwd.1} parent=5 // pred_region
        %s208 = ssub.s32 %s16, 1
        // Predicated region
        $region13: #{ae_encoder_fwd.1} parent=11 // pred_check
          %p209 = pneg %p63
        $region14: #{ae_encoder_fwd.1} parent=11 // pred_check_branch
          %211 = sbr.rel (%p209) target = $region16
        $region15: #{ae_encoder_fwd.1} parent=11 // pred_region
          _
        $region16: #{ae_encoder_fwd.1} parent=11 // pred_fallthru
          _
        // Predicated region
        $region17: #{ae_encoder_fwd.1} parent=11 // pred_check
          %p212 = pneg %p84
        $region18: #{ae_encoder_fwd.1} parent=11 // pred_check_branch
          %214 = sbr.rel (%p212) target = $region20
        $region19: #{ae_encoder_fwd.1} parent=11 // pred_region
          _
        $region20: #{ae_encoder_fwd.1} parent=11 // pred_fallthru
          _
        // Predicated region
        $region21: #{ae_encoder_fwd.1} parent=11 // pred_check
          %p215 = pneg %p105
        $region22: #{ae_encoder_fwd.1} parent=11 // pred_check_branch
          %217 = sbr.rel (%p215) target = $region24
        $region23: #{ae_encoder_fwd.1} parent=11 // pred_region
          _
        $region24: #{ae_encoder_fwd.1} parent=11 // pred_fallthru
          _
        // Predicated region
        $region25: #{ae_encoder_fwd.1} parent=11 // pred_check
          %p218 = pneg %p126
        $region26: #{ae_encoder_fwd.1} parent=11 // pred_check_branch
          %220 = sbr.rel (%p218) target = $region28
        $region27: #{ae_encoder_fwd.1} parent=11 // pred_region
          _
        $region28: #{ae_encoder_fwd.1} parent=11 // pred_fallthru
          _
        // Predicated region
        $region29: #{ae_encoder_fwd.1} parent=11 // pred_check
          %p221 = pneg %p147
        $region30: #{ae_encoder_fwd.1} parent=11 // pred_check_branch
          %223 = sbr.rel (%p221) target = $region32
        $region31: #{ae_encoder_fwd.1} parent=11 // pred_region
          _
        $region32: #{ae_encoder_fwd.1} parent=11 // pred_fallthru
          _
        // Predicated region
        $region33: #{ae_encoder_fwd.1} parent=11 // pred_check
          %p224 = pneg %p168
        $region34: #{ae_encoder_fwd.1} parent=11 // pred_check_branch
          %226 = sbr.rel (%p224) target = $region36
        $region35: #{ae_encoder_fwd.1} parent=11 // pred_region
          _
        $region36: #{ae_encoder_fwd.1} parent=11 // pred_fallthru
          _
      $region12: #{ae_encoder_fwd.1} parent=5 // pred_fallthru
        _
      %p227 = scmp.lt.s32.totalorder %s16, 2
      // Predicated region
      $region37: #{ae_encoder_fwd.1} parent=5 // pred_check
        %p228 = pneg %p227
      $region38: #{ae_encoder_fwd.1} parent=5 // pred_check_branch
        %230 = sbr.rel (%p228) target = $region40
      $region39: #{ae_encoder_fwd.1} parent=5 // pred_region
        // Predicated region
        $region41: #{ae_encoder_fwd.1} parent=39 // pred_check
          %p231 = pneg %p36
        $region42: #{ae_encoder_fwd.1} parent=39 // pred_check_branch
          %233 = sbr.rel (%p231) target = $region44
        $region43: #{ae_encoder_fwd.1} parent=39 // pred_region
          %s234 = smul.u32 16, %s16
          %p235 = scmp.lt.s32.totalorder %s234, 31
          %s236 = scalar_select %p235, %s234, 31
          %s237 = smul.addr %s236, 8
          %s238 = scalar_lea.vmem %s0, %s237
          %s239 = smul.u32 16, %s16
        $region44: #{ae_encoder_fwd.1} parent=39 // pred_fallthru
          _
      $region40: #{ae_encoder_fwd.1} parent=5 // pred_fallthru
        _
      %p240 = scmp.le.s32.totalorder 1, %s16
      %p241 = scmp.lt.s32.totalorder %s16, 3
      %p242 = pnand %p240, %p241
      %p243 = pneg %p242
      // Predicated region
      $region45: #{ae_encoder_fwd.1} parent=5 // pred_check
        _
      $region46: #{ae_encoder_fwd.1} parent=5 // pred_check_branch
        %245 = sbr.rel (%p242) target = $region48
      $region47: #{ae_encoder_fwd.1} parent=5 // pred_region
        %s246 = ssub.s32 %s16, 1
        %s247 = smul.u32 16, %s21
        %p248 = scmp.lt.s32.totalorder %s247, 31
        %s249 = scalar_select %p248, %s247, 31
        %s250 = smul.addr %s249, 8
        %s251 = scalar_lea.vmem %s0, %s250
        %p252 = pneg %p42
        %p253 = pneg %p39
        %p254 = pneg %p63
        %p255 = pneg %p60
        %p256 = pneg %p84
        %p257 = pneg %p81
        %p258 = pneg %p105
        %p259 = pneg %p102
        %p260 = pneg %p126
        %p261 = pneg %p123
        %p262 = pneg %p147
        %p263 = pneg %p144
        %p264 = pneg %p168
        %p265 = pneg %p165
        %p266 = pneg %p194
        %p267 = pneg %p191
        %s268 = sand.u32 %s181, 1
        %s269 = scalar_lea.sflag [#allocation4], %s268
        %s270 = sand.u32 %s181, 1
        %s271 = smul.addr %s270, 8
        %s272 = scalar_lea.vmem [#allocation3], %s271
        %s273 = smul.u32 16, %s21
        %p274 = scmp.lt.s32.totalorder %s273, 31
        %s275 = scalar_select %p274, %s273, 31
        %s276 = smul.addr %s275, 8
        %s277 = scalar_lea.vmem %s0, %s276
        %s278 = smul.u32 16, %s21
        %v280 = vld [vmem:[%s277] sm:$0xff]
        %v281 = vld [vmem:[%s277 + $0x8] sm:$0xff]
        %v282 = vld [vmem:[%s277 + $0x10] sm:$0xff]
        %v283 = vld [vmem:[%s277 + $0x18] sm:$0xff]
        %v284 = vld [vmem:[%s277 + $0x20] sm:$0xff]
        %v285 = vld [vmem:[%s277 + $0x28] sm:$0xff]
        %v286 = vld [vmem:[%s277 + $0x30] sm:$0xff]
        %v287 = vld [vmem:[%s277 + $0x38] sm:$0xff]
        %v288 = vld [vmem:[%s277 + $0x40] sm:$0xff]
        %v289 = vld [vmem:[%s277 + $0x48] sm:$0xff]
        %v290 = vld [vmem:[%s277 + $0x50] sm:$0xff]
        %v291 = vld [vmem:[%s277 + $0x58] sm:$0xff]
        %v292 = vld [vmem:[%s277 + $0x60] sm:$0xff]
        %v293 = vld [vmem:[%s277 + $0x68] sm:$0xff]
        %v294 = vld [vmem:[%s277 + $0x70] sm:$0xff]
        %v295 = vld [vmem:[%s277 + $0x78] sm:$0xff]
        %v296 = vlaneseq
        %v297 = vshrl.u32 %v296, 7
        %v298 = vadd.s32 %v297, 8
        %v299 = vadd.s32 %v297, 16
        %v300 = vadd.s32 %v297, 24
        %v301 = vadd.s32 %v297, 32
        %v302 = vadd.s32 %v297, 40
        %v303 = vadd.s32 %v297, 48
        %v304 = vadd.s32 %v297, 56
        %v305 = vadd.s32 %v297, 64
        %v306 = vadd.s32 %v297, 72
        %v307 = vadd.s32 %v297, 80
        %v308 = vadd.s32 %v297, 88
        %v309 = vadd.s32 %v297, 96
        %v310 = vadd.s32 %v297, 104
        %v311 = vadd.s32 %v297, 112
        %v312 = vadd.s32 %v297, 120
        %vm313 = vcmp.lt.s32.totalorder %v297, 0
        %v314 = vsub.s32 0, %v297
        %v315 = vsel %vm313, %v314, %v297
        %v316 = vshrl.u32 %v315, 4
        %v317 = vand.u32 %v315, 15
        %v318 = vsub.s32 0, %v317
        %v319 = vsel %vm313, %v318, %v317
        %vm320 = vcmp.lt.s32.totalorder %v298, 0
        %v321 = vsub.s32 0, %v298
        %v322 = vsel %vm320, %v321, %v298
        %v323 = vshrl.u32 %v322, 4
        %v324 = vand.u32 %v322, 15
        %v325 = vsub.s32 0, %v324
        %v326 = vsel %vm320, %v325, %v324
        %vm327 = vcmp.lt.s32.totalorder %v299, 0
        %v328 = vsub.s32 0, %v299
        %v329 = vsel %vm327, %v328, %v299
        %v330 = vshrl.u32 %v329, 4
        %v331 = vand.u32 %v329, 15
        %v332 = vsub.s32 0, %v331
        %v333 = vsel %vm327, %v332, %v331
        %vm334 = vcmp.lt.s32.totalorder %v300, 0
        %v335 = vsub.s32 0, %v300
        %v336 = vsel %vm334, %v335, %v300
        %v337 = vshrl.u32 %v336, 4
        %v338 = vand.u32 %v336, 15
        %v339 = vsub.s32 0, %v338
        %v340 = vsel %vm334, %v339, %v338
        %vm341 = vcmp.lt.s32.totalorder %v301, 0
        %v342 = vsub.s32 0, %v301
        %v343 = vsel %vm341, %v342, %v301
        %v344 = vshrl.u32 %v343, 4
        %v345 = vand.u32 %v343, 15
        %v346 = vsub.s32 0, %v345
        %v347 = vsel %vm341, %v346, %v345
        %vm348 = vcmp.lt.s32.totalorder %v302, 0
        %v349 = vsub.s32 0, %v302
        %v350 = vsel %vm348, %v349, %v302
        %v351 = vshrl.u32 %v350, 4
        %v352 = vand.u32 %v350, 15
        %v353 = vsub.s32 0, %v352
        %v354 = vsel %vm348, %v353, %v352
        %vm355 = vcmp.lt.s32.totalorder %v303, 0
        %v356 = vsub.s32 0, %v303
        %v357 = vsel %vm355, %v356, %v303
        %v358 = vshrl.u32 %v357, 4
        %v359 = vand.u32 %v357, 15
        %v360 = vsub.s32 0, %v359
        %v361 = vsel %vm355, %v360, %v359
        %vm362 = vcmp.lt.s32.totalorder %v304, 0
        %v363 = vsub.s32 0, %v304
        %v364 = vsel %vm362, %v363, %v304
        %v365 = vshrl.u32 %v364, 4
        %v366 = vand.u32 %v364, 15
        %v367 = vsub.s32 0, %v366
        %v368 = vsel %vm362, %v367, %v366
        %vm369 = vcmp.lt.s32.totalorder %v305, 0
        %v370 = vsub.s32 0, %v305
        %v371 = vsel %vm369, %v370, %v305
        %v372 = vshrl.u32 %v371, 4
        %v373 = vand.u32 %v371, 15
        %v374 = vsub.s32 0, %v373
        %v375 = vsel %vm369, %v374, %v373
        %vm376 = vcmp.lt.s32.totalorder %v306, 0
        %v377 = vsub.s32 0, %v306
        %v378 = vsel %vm376, %v377, %v306
        %v379 = vshrl.u32 %v378, 4
        %v380 = vand.u32 %v378, 15
        %v381 = vsub.s32 0, %v380
        %v382 = vsel %vm376, %v381, %v380
        %vm383 = vcmp.lt.s32.totalorder %v307, 0
        %v384 = vsub.s32 0, %v307
        %v385 = vsel %vm383, %v384, %v307
        %v386 = vshrl.u32 %v385, 4
        %v387 = vand.u32 %v385, 15
        %v388 = vsub.s32 0, %v387
        %v389 = vsel %vm383, %v388, %v387
        %vm390 = vcmp.lt.s32.totalorder %v308, 0
        %v391 = vsub.s32 0, %v308
        %v392 = vsel %vm390, %v391, %v308
        %v393 = vshrl.u32 %v392, 4
        %v394 = vand.u32 %v392, 15
        %v395 = vsub.s32 0, %v394
        %v396 = vsel %vm390, %v395, %v394
        %vm397 = vcmp.lt.s32.totalorder %v309, 0
        %v398 = vsub.s32 0, %v309
        %v399 = vsel %vm397, %v398, %v309
        %v400 = vshrl.u32 %v399, 4
        %v401 = vand.u32 %v399, 15
        %v402 = vsub.s32 0, %v401
        %v403 = vsel %vm397, %v402, %v401
        %vm404 = vcmp.lt.s32.totalorder %v310, 0
        %v405 = vsub.s32 0, %v310
        %v406 = vsel %vm404, %v405, %v310
        %v407 = vshrl.u32 %v406, 4
        %v408 = vand.u32 %v406, 15
        %v409 = vsub.s32 0, %v408
        %v410 = vsel %vm404, %v409, %v408
        %vm411 = vcmp.lt.s32.totalorder %v311, 0
        %v412 = vsub.s32 0, %v311
        %v413 = vsel %vm411, %v412, %v311
        %v414 = vshrl.u32 %v413, 4
        %v415 = vand.u32 %v413, 15
        %v416 = vsub.s32 0, %v415
        %v417 = vsel %vm411, %v416, %v415
        %vm418 = vcmp.lt.s32.totalorder %v312, 0
        %v419 = vsub.s32 0, %v312
        %v420 = vsel %vm418, %v419, %v312
        %v421 = vshrl.u32 %v420, 4
        %v422 = vand.u32 %v420, 15
        %v423 = vsub.s32 0, %v422
        %v424 = vsel %vm418, %v423, %v422
        %vm425 = vcmp.ne.s32.totalorder %v319, 0
        %vm426 = vcmp.ne.s32.totalorder %v326, 0
        %vm427 = vcmp.ne.s32.totalorder %v333, 0
        %vm428 = vcmp.ne.s32.totalorder %v340, 0
        %vm429 = vcmp.ne.s32.totalorder %v347, 0
        %vm430 = vcmp.ne.s32.totalorder %v354, 0
        %vm431 = vcmp.ne.s32.totalorder %v361, 0
        %vm432 = vcmp.ne.s32.totalorder %v368, 0
        %vm433 = vcmp.ne.s32.totalorder %v375, 0
        %vm434 = vcmp.ne.s32.totalorder %v382, 0
        %vm435 = vcmp.ne.s32.totalorder %v389, 0
        %vm436 = vcmp.ne.s32.totalorder %v396, 0
        %vm437 = vcmp.ne.s32.totalorder %v403, 0
        %vm438 = vcmp.ne.s32.totalorder %v410, 0
        %vm439 = vcmp.ne.s32.totalorder %v417, 0
        %vm440 = vcmp.ne.s32.totalorder %v424, 0
        %vm441 = vcmp.lt.s32.totalorder %v319, 0
        %vm442 = vcmp.lt.s32.totalorder %v326, 0
        %vm443 = vcmp.lt.s32.totalorder %v333, 0
        %vm444 = vcmp.lt.s32.totalorder %v340, 0
        %vm445 = vcmp.lt.s32.totalorder %v347, 0
        %vm446 = vcmp.lt.s32.totalorder %v354, 0
        %vm447 = vcmp.lt.s32.totalorder %v361, 0
        %vm448 = vcmp.lt.s32.totalorder %v368, 0
        %vm449 = vcmp.lt.s32.totalorder %v375, 0
        %vm450 = vcmp.lt.s32.totalorder %v382, 0
        %vm451 = vcmp.lt.s32.totalorder %v389, 0
        %vm452 = vcmp.lt.s32.totalorder %v396, 0
        %vm453 = vcmp.lt.s32.totalorder %v403, 0
        %vm454 = vcmp.lt.s32.totalorder %v410, 0
        %vm455 = vcmp.lt.s32.totalorder %v417, 0
        %vm456 = vcmp.lt.s32.totalorder %v424, 0
        %vm457 = vmand %vm441, %vm425
        %vm458 = vmand %vm442, %vm426
        %vm459 = vmand %vm443, %vm427
        %vm460 = vmand %vm444, %vm428
        %vm461 = vmand %vm445, %vm429
        %vm462 = vmand %vm446, %vm430
        %vm463 = vmand %vm447, %vm431
        %vm464 = vmand %vm448, %vm432
        %vm465 = vmand %vm449, %vm433
        %vm466 = vmand %vm450, %vm434
        %vm467 = vmand %vm451, %vm435
        %vm468 = vmand %vm452, %vm436
        %vm469 = vmand %vm453, %vm437
        %vm470 = vmand %vm454, %vm438
        %vm471 = vmand %vm455, %vm439
        %vm472 = vmand %vm456, %vm440
        %v473 = vadd.s32 %v319, 16
        %v474 = vadd.s32 %v326, 16
        %v475 = vadd.s32 %v333, 16
        %v476 = vadd.s32 %v340, 16
        %v477 = vadd.s32 %v347, 16
        %v478 = vadd.s32 %v354, 16
        %v479 = vadd.s32 %v361, 16
        %v480 = vadd.s32 %v368, 16
        %v481 = vadd.s32 %v375, 16
        %v482 = vadd.s32 %v382, 16
        %v483 = vadd.s32 %v389, 16
        %v484 = vadd.s32 %v396, 16
        %v485 = vadd.s32 %v403, 16
        %v486 = vadd.s32 %v410, 16
        %v487 = vadd.s32 %v417, 16
        %v488 = vadd.s32 %v424, 16
        %v489 = vsel %vm457, %v473, %v319
        %v490 = vsel %vm458, %v474, %v326
        %v491 = vsel %vm459, %v475, %v333
        %v492 = vsel %vm460, %v476, %v340
        %v493 = vsel %vm461, %v477, %v347
        %v494 = vsel %vm462, %v478, %v354
        %v495 = vsel %vm463, %v479, %v361
        %v496 = vsel %vm464, %v480, %v368
        %v497 = vsel %vm465, %v481, %v375
        %v498 = vsel %vm466, %v482, %v382
        %v499 = vsel %vm467, %v483, %v389
        %v500 = vsel %vm468, %v484, %v396
        %v501 = vsel %vm469, %v485, %v403
        %v502 = vsel %vm470, %v486, %v410
        %v503 = vsel %vm471, %v487, %v417
        %v504 = vsel %vm472, %v488, %v424
        %vm505 = vcmp.eq.s32.totalorder %v489, 0
        %vm506 = vcmp.eq.s32.totalorder %v490, 0
        %vm507 = vcmp.eq.s32.totalorder %v491, 0
        %vm508 = vcmp.eq.s32.totalorder %v492, 0
        %vm509 = vcmp.eq.s32.totalorder %v493, 0
        %vm510 = vcmp.eq.s32.totalorder %v494, 0
        %vm511 = vcmp.eq.s32.totalorder %v495, 0
        %vm512 = vcmp.eq.s32.totalorder %v496, 0
        %vm513 = vcmp.eq.s32.totalorder %v497, 0
        %vm514 = vcmp.eq.s32.totalorder %v498, 0
        %vm515 = vcmp.eq.s32.totalorder %v499, 0
        %vm516 = vcmp.eq.s32.totalorder %v500, 0
        %vm517 = vcmp.eq.s32.totalorder %v501, 0
        %vm518 = vcmp.eq.s32.totalorder %v502, 0
        %vm519 = vcmp.eq.s32.totalorder %v503, 0
        %vm520 = vcmp.eq.s32.totalorder %v504, 0
        %v521 = vrot.slane %v280, 7
        %v522 = vrot.slane %v281, 7
        %v523 = vrot.slane %v282, 7
        %v524 = vrot.slane %v283, 7
        %v525 = vrot.slane %v284, 7
        %v526 = vrot.slane %v285, 7
        %v527 = vrot.slane %v286, 7
        %v528 = vrot.slane %v287, 7
        %v529 = vrot.slane %v288, 7
        %v530 = vrot.slane %v289, 7
        %v531 = vrot.slane %v290, 7
        %v532 = vrot.slane %v291, 7
        %v533 = vrot.slane %v292, 7
        %v534 = vrot.slane %v293, 7
        %v535 = vrot.slane %v294, 7
        %v536 = vrot.slane %v295, 7
        %vm537 = vcmp.lt.s32.totalorder %v297, 1
        %v538 = vsel %vm537, %v535, %v536
        %v539 = vsel %vm537, %v534, %v535
        %v540 = vsel %vm537, %v533, %v534
        %v541 = vsel %vm537, %v532, %v533
        %v542 = vsel %vm537, %v531, %v532
        %v543 = vsel %vm537, %v530, %v531
        %v544 = vsel %vm537, %v529, %v530
        %v545 = vsel %vm537, %v528, %v529
        %v546 = vsel %vm537, %v527, %v528
        %v547 = vsel %vm537, %v526, %v527
        %v548 = vsel %vm537, %v525, %v526
        %v549 = vsel %vm537, %v524, %v525
        %v550 = vsel %vm537, %v523, %v524
        %v551 = vsel %vm537, %v522, %v523
        %v552 = vsel %vm537, %v521, %v522
        %v553 = vsel %vm537, %v536, %v521
        %v554 = vsel %vm505, 1, 0
        %v555 = vsel %vm506, 1, 0
        %v556 = vsel %vm507, 1, 0
        %v557 = vsel %vm508, 1, 0
        %v558 = vsel %vm509, 1, 0
        %v559 = vsel %vm510, 1, 0
        %v560 = vsel %vm511, 1, 0
        %v561 = vsel %vm512, 1, 0
        %v562 = vsel %vm513, 1, 0
        %v563 = vsel %vm514, 1, 0
        %v564 = vsel %vm515, 1, 0
        %v565 = vsel %vm516, 1, 0
        %v566 = vsel %vm517, 1, 0
        %v567 = vsel %vm518, 1, 0
        %v568 = vsel %vm519, 1, 0
        %v569 = vsel %vm520, 1, 0
        %vm570 = vcmp.eq.s32.totalorder %v554, 1
        %vm571 = vcmp.eq.s32.totalorder %v555, 1
        %vm572 = vcmp.eq.s32.totalorder %v556, 1
        %vm573 = vcmp.eq.s32.totalorder %v557, 1
        %vm574 = vcmp.eq.s32.totalorder %v558, 1
        %vm575 = vcmp.eq.s32.totalorder %v559, 1
        %vm576 = vcmp.eq.s32.totalorder %v560, 1
        %vm577 = vcmp.eq.s32.totalorder %v561, 1
        %vm578 = vcmp.eq.s32.totalorder %v562, 1
        %vm579 = vcmp.eq.s32.totalorder %v563, 1
        %vm580 = vcmp.eq.s32.totalorder %v564, 1
        %vm581 = vcmp.eq.s32.totalorder %v565, 1
        %vm582 = vcmp.eq.s32.totalorder %v566, 1
        %vm583 = vcmp.eq.s32.totalorder %v567, 1
        %vm584 = vcmp.eq.s32.totalorder %v568, 1
        %vm585 = vcmp.eq.s32.totalorder %v569, 1
        %v586 = vsel %vm570, 0.0, %v553
        %v587 = vsel %vm571, 0.0, %v552
        %v588 = vsel %vm572, 0.0, %v551
        %v589 = vsel %vm573, 0.0, %v550
        %v590 = vsel %vm574, 0.0, %v549
        %v591 = vsel %vm575, 0.0, %v548
        %v592 = vsel %vm576, 0.0, %v547
        %v593 = vsel %vm577, 0.0, %v546
        %v594 = vsel %vm578, 0.0, %v545
        %v595 = vsel %vm579, 0.0, %v544
        %v596 = vsel %vm580, 0.0, %v543
        %v597 = vsel %vm581, 0.0, %v542
        %v598 = vsel %vm582, 0.0, %v541
        %v599 = vsel %vm583, 0.0, %v540
        %v600 = vsel %vm584, 0.0, %v539
        %v601 = vsel %vm585, 0.0, %v538
        %vm602 = vcmp.eq.s32.totalorder %v489, 15
        %vm603 = vcmp.eq.s32.totalorder %v490, 15
        %vm604 = vcmp.eq.s32.totalorder %v491, 15
        %vm605 = vcmp.eq.s32.totalorder %v492, 15
        %vm606 = vcmp.eq.s32.totalorder %v493, 15
        %vm607 = vcmp.eq.s32.totalorder %v494, 15
        %vm608 = vcmp.eq.s32.totalorder %v495, 15
        %vm609 = vcmp.eq.s32.totalorder %v496, 15
        %vm610 = vcmp.eq.s32.totalorder %v497, 15
        %vm611 = vcmp.eq.s32.totalorder %v498, 15
        %vm612 = vcmp.eq.s32.totalorder %v499, 15
        %vm613 = vcmp.eq.s32.totalorder %v500, 15
        %vm614 = vcmp.eq.s32.totalorder %v501, 15
        %vm615 = vcmp.eq.s32.totalorder %v502, 15
        %vm616 = vcmp.eq.s32.totalorder %v503, 15
        %vm617 = vcmp.eq.s32.totalorder %v504, 15
        %v618 = vrot.slane %v280, 1
        %v619 = vrot.slane %v281, 1
        %v620 = vrot.slane %v282, 1
        %v621 = vrot.slane %v283, 1
        %v622 = vrot.slane %v284, 1
        %v623 = vrot.slane %v285, 1
        %v624 = vrot.slane %v286, 1
        %v625 = vrot.slane %v287, 1
        %v626 = vrot.slane %v288, 1
        %v627 = vrot.slane %v289, 1
        %v628 = vrot.slane %v290, 1
        %v629 = vrot.slane %v291, 1
        %v630 = vrot.slane %v292, 1
        %v631 = vrot.slane %v293, 1
        %v632 = vrot.slane %v294, 1
        %v633 = vrot.slane %v295, 1
        %vm634 = vcmp.lt.s32.totalorder %v297, 7
        %v635 = vsel %vm634, %v632, %v633
        %v636 = vsel %vm634, %v631, %v632
        %v637 = vsel %vm634, %v630, %v631
        %v638 = vsel %vm634, %v629, %v630
        %v639 = vsel %vm634, %v628, %v629
        %v640 = vsel %vm634, %v627, %v628
        %v641 = vsel %vm634, %v626, %v627
        %v642 = vsel %vm634, %v625, %v626
        %v643 = vsel %vm634, %v624, %v625
        %v644 = vsel %vm634, %v623, %v624
        %v645 = vsel %vm634, %v622, %v623
        %v646 = vsel %vm634, %v621, %v622
        %v647 = vsel %vm634, %v620, %v621
        %v648 = vsel %vm634, %v619, %v620
        %v649 = vsel %vm634, %v618, %v619
        %v650 = vsel %vm634, %v633, %v618
        %v651 = vsel %vm602, 1, 0
        %v652 = vsel %vm603, 1, 0
        %v653 = vsel %vm604, 1, 0
        %v654 = vsel %vm605, 1, 0
        %v655 = vsel %vm606, 1, 0
        %v656 = vsel %vm607, 1, 0
        %v657 = vsel %vm608, 1, 0
        %v658 = vsel %vm609, 1, 0
        %v659 = vsel %vm610, 1, 0
        %v660 = vsel %vm611, 1, 0
        %v661 = vsel %vm612, 1, 0
        %v662 = vsel %vm613, 1, 0
        %v663 = vsel %vm614, 1, 0
        %v664 = vsel %vm615, 1, 0
        %v665 = vsel %vm616, 1, 0
        %v666 = vsel %vm617, 1, 0
        %vm667 = vcmp.eq.s32.totalorder %v651, 1
        %vm668 = vcmp.eq.s32.totalorder %v652, 1
        %vm669 = vcmp.eq.s32.totalorder %v653, 1
        %vm670 = vcmp.eq.s32.totalorder %v654, 1
        %vm671 = vcmp.eq.s32.totalorder %v655, 1
        %vm672 = vcmp.eq.s32.totalorder %v656, 1
        %vm673 = vcmp.eq.s32.totalorder %v657, 1
        %vm674 = vcmp.eq.s32.totalorder %v658, 1
        %vm675 = vcmp.eq.s32.totalorder %v659, 1
        %vm676 = vcmp.eq.s32.totalorder %v660, 1
        %vm677 = vcmp.eq.s32.totalorder %v661, 1
        %vm678 = vcmp.eq.s32.totalorder %v662, 1
        %vm679 = vcmp.eq.s32.totalorder %v663, 1
        %vm680 = vcmp.eq.s32.totalorder %v664, 1
        %vm681 = vcmp.eq.s32.totalorder %v665, 1
        %vm682 = vcmp.eq.s32.totalorder %v666, 1
        %v683 = vsel %vm667, 0.0, %v649
        %v684 = vsel %vm668, 0.0, %v648
        %v685 = vsel %vm669, 0.0, %v647
        %v686 = vsel %vm670, 0.0, %v646
        %v687 = vsel %vm671, 0.0, %v645
        %v688 = vsel %vm672, 0.0, %v644
        %v689 = vsel %vm673, 0.0, %v643
        %v690 = vsel %vm674, 0.0, %v642
        %v691 = vsel %vm675, 0.0, %v641
        %v692 = vsel %vm676, 0.0, %v640
        %v693 = vsel %vm677, 0.0, %v639
        %v694 = vsel %vm678, 0.0, %v638
        %v695 = vsel %vm679, 0.0, %v637
        %v696 = vsel %vm680, 0.0, %v636
        %v697 = vsel %vm681, 0.0, %v635
        %v698 = vsel %vm682, 0.0, %v650
        %v699 = vpack.c.bf16 %v281, %v280
        %v700 = vpack.c.bf16 %v283, %v282
        %v701 = vpack.c.bf16 %v285, %v284
        %v702 = vpack.c.bf16 %v287, %v286
        %v703 = vpack.c.bf16 %v289, %v288
        %v704 = vpack.c.bf16 %v291, %v290
        %v705 = vpack.c.bf16 %v293, %v292
        %v706 = vpack.c.bf16 %v295, %v294
        %s707 = scalar_lea.vmem %s1, 2
        %v708 = vld [vmem:[%s707] sm:$0x3]
        %v709 = vpack.c.bf16 %v587, %v586
        %v710 = vpack.c.bf16 %v589, %v588
        %v711 = vpack.c.bf16 %v591, %v590
        %v712 = vpack.c.bf16 %v593, %v592
        %v713 = vpack.c.bf16 %v595, %v594
        %v714 = vpack.c.bf16 %v597, %v596
        %v715 = vpack.c.bf16 %v599, %v598
        %v716 = vpack.c.bf16 %v601, %v600
        %v717 = vld [vmem:[%s1] sm:$0x3]
        %vm718 = vcmask 31744
        %v720 = vsel %vm718, %v709, 0
        %v723 = vsel %vm718, %v710, 0
        %v726 = vsel %vm718, %v711, 0
        %v729 = vsel %vm718, %v712, 0
        %v732 = vsel %vm718, %v713, 0
        %v735 = vsel %vm718, %v714, 0
        %v738 = vsel %vm718, %v715, 0
        %v741 = vsel %vm718, %v716, 0
        %vm743 = vcmask 1041408
        %v745 = vsel %vm743, %v717, 0
        %747 = vmatprep.subr.bf16.mxu0 0
        %748 = vmatpush1.bf16.msra.mxu0 0
        %749 = vmatprep.subr.bf16.mxu0 0
        %750 = vmatpush1.bf16.msra.mxu0 0
        %751 = vmatprep.subr.bf16.mxu0 0
        %752 = vmatpush1.bf16.msra.mxu0 0
        %753 = vmatprep.subr.bf16.mxu0 0
        %754 = vmatpush1.bf16.msra.mxu0 0
        %755 = vmatprep.subr.bf16.mxu0 0
        %756 = vmatpush1.bf16.msra.mxu0 0
        %757 = vmatprep.subr.bf16.mxu0 0
        %758 = vmatpush1.bf16.msra.mxu0 0
        %759 = vmatprep.subr.bf16.mxu0 0
        %760 = vmatpush1.bf16.msra.mxu0 0
        %761 = vmatprep.subr.bf16.mxu0 0
        %762 = vmatpush1.bf16.msra.mxu0 %v745
        %763 = vmatprep.subr.bf16.mxu0 0
        %764 = vmatpush2.bf16.msra.mxu0 0
        %765 = vmatprep.subr.bf16.mxu0 0
        %766 = vmatpush2.bf16.msra.mxu0 0
        %767 = vmatprep.subr.bf16.mxu0 0
        %768 = vmatpush2.bf16.msra.mxu0 0
        %769 = vmatprep.subr.bf16.mxu0 0
        %770 = vmatpush2.bf16.msra.mxu0 0
        %771 = vmatprep.subr.bf16.mxu0 0
        %772 = vmatpush2.bf16.msra.mxu0 0
        %773 = vmatprep.subr.bf16.mxu0 0
        %774 = vmatpush2.bf16.msra.mxu0 0
        %775 = vmatprep.subr.bf16.mxu0 0
        %776 = vmatpush2.bf16.msra.mxu0 0
        %777 = vmatprep.subr.bf16.mxu0 0
        %778 = vmatpush2.bf16.msra.mxu0 0
        %779 = vmatprep.mubr.bf16.mxu0 0
        %780 = vmatmul.mubr.bf16.gmra.mxu0 %v720
        %v781 = vpop.f32.mrf.mxu0
        %v782 = vadd.f32 0.0, %v781
        %v783 = vpop.f32.mrf.mxu0
        %v784 = vpop.f32.mrf.mxu0
        %v785 = vadd.f32 0.0, %v784
        %v786 = vpop.f32.mrf.mxu0
        %787 = vmatprep.mubr.bf16.mxu0 0
        %788 = vmatmul.mubr.bf16.gmra.mxu0 %v723
        %v789 = vpop.f32.mrf.mxu0
        %v790 = vadd.f32 0.0, %v789
        %v791 = vpop.f32.mrf.mxu0
        %v792 = vpop.f32.mrf.mxu0
        %v793 = vadd.f32 0.0, %v792
        %v794 = vpop.f32.mrf.mxu0
        %795 = vmatprep.mubr.bf16.mxu0 0
        %796 = vmatmul.mubr.bf16.gmra.mxu0 %v726
        %v797 = vpop.f32.mrf.mxu0
        %v798 = vadd.f32 0.0, %v797
        %v799 = vpop.f32.mrf.mxu0
        %v800 = vpop.f32.mrf.mxu0
        %v801 = vadd.f32 0.0, %v800
        %v802 = vpop.f32.mrf.mxu0
        %803 = vmatprep.mubr.bf16.mxu0 0
        %804 = vmatmul.mubr.bf16.gmra.mxu0 %v729
        %v805 = vpop.f32.mrf.mxu0
        %v806 = vadd.f32 0.0, %v805
        %v807 = vpop.f32.mrf.mxu0
        %v808 = vpop.f32.mrf.mxu0
        %v809 = vadd.f32 0.0, %v808
        %v810 = vpop.f32.mrf.mxu0
        %811 = vmatprep.mubr.bf16.mxu0 0
        %812 = vmatmul.mubr.bf16.gmra.mxu0 %v732
        %v813 = vpop.f32.mrf.mxu0
        %v814 = vadd.f32 0.0, %v813
        %v815 = vpop.f32.mrf.mxu0
        %v816 = vpop.f32.mrf.mxu0
        %v817 = vadd.f32 0.0, %v816
        %v818 = vpop.f32.mrf.mxu0
        %819 = vmatprep.mubr.bf16.mxu0 0
        %820 = vmatmul.mubr.bf16.gmra.mxu0 %v735
        %v821 = vpop.f32.mrf.mxu0
        %v822 = vadd.f32 0.0, %v821
        %v823 = vpop.f32.mrf.mxu0
        %v824 = vpop.f32.mrf.mxu0
        %v825 = vadd.f32 0.0, %v824
        %v826 = vpop.f32.mrf.mxu0
        %827 = vmatprep.mubr.bf16.mxu0 0
        %828 = vmatmul.mubr.bf16.gmra.mxu0 %v738
        %v829 = vpop.f32.mrf.mxu0
        %v830 = vadd.f32 0.0, %v829
        %v831 = vpop.f32.mrf.mxu0
        %v832 = vpop.f32.mrf.mxu0
        %v833 = vadd.f32 0.0, %v832
        %v834 = vpop.f32.mrf.mxu0
        %835 = vmatprep.mubr.bf16.mxu0 0
        %836 = vmatmul.mubr.bf16.gmra.mxu0 %v741
        %v837 = vpop.f32.mrf.mxu0
        %v838 = vadd.f32 0.0, %v837
        %v839 = vpop.f32.mrf.mxu0
        %v840 = vpop.f32.mrf.mxu0
        %v841 = vadd.f32 0.0, %v840
        %v842 = vpop.f32.mrf.mxu0
        %843 = vdwg.mxu0
        %v845 = vsel %vm718, %v699, 0
        %v848 = vsel %vm718, %v700, 0
        %v851 = vsel %vm718, %v701, 0
        %v854 = vsel %vm718, %v702, 0
        %v857 = vsel %vm718, %v703, 0
        %v860 = vsel %vm718, %v704, 0
        %v863 = vsel %vm718, %v705, 0
        %v866 = vsel %vm718, %v706, 0
        %v869 = vsel %vm743, %v708, 0
        %871 = vmatprep.subr.bf16.mxu0 0
        %872 = vmatpush1.bf16.msra.mxu0 0
        %873 = vmatprep.subr.bf16.mxu0 0
        %874 = vmatpush1.bf16.msra.mxu0 0
        %875 = vmatprep.subr.bf16.mxu0 0
        %876 = vmatpush1.bf16.msra.mxu0 0
        %877 = vmatprep.subr.bf16.mxu0 0
        %878 = vmatpush1.bf16.msra.mxu0 0
        %879 = vmatprep.subr.bf16.mxu0 0
        %880 = vmatpush1.bf16.msra.mxu0 0
        %881 = vmatprep.subr.bf16.mxu0 0
        %882 = vmatpush1.bf16.msra.mxu0 0
        %883 = vmatprep.subr.bf16.mxu0 0
        %884 = vmatpush1.bf16.msra.mxu0 0
        %885 = vmatprep.subr.bf16.mxu0 0
        %886 = vmatpush1.bf16.msra.mxu0 %v869
        %887 = vmatprep.subr.bf16.mxu0 0
        %888 = vmatpush2.bf16.msra.mxu0 0
        %889 = vmatprep.subr.bf16.mxu0 0
        %890 = vmatpush2.bf16.msra.mxu0 0
        %891 = vmatprep.subr.bf16.mxu0 0
        %892 = vmatpush2.bf16.msra.mxu0 0
        %893 = vmatprep.subr.bf16.mxu0 0
        %894 = vmatpush2.bf16.msra.mxu0 0
        %895 = vmatprep.subr.bf16.mxu0 0
        %896 = vmatpush2.bf16.msra.mxu0 0
        %897 = vmatprep.subr.bf16.mxu0 0
        %898 = vmatpush2.bf16.msra.mxu0 0
        %899 = vmatprep.subr.bf16.mxu0 0
        %900 = vmatpush2.bf16.msra.mxu0 0
        %901 = vmatprep.subr.bf16.mxu0 0
        %902 = vmatpush2.bf16.msra.mxu0 0
        %903 = vmatprep.mubr.bf16.mxu0 0
        %904 = vmatmul.mubr.bf16.gmra.mxu0 %v845
        %v905 = vpop.f32.mrf.mxu0
        %v906 = vadd.f32 %v782, %v905
        %v907 = vpop.f32.mrf.mxu0
        %v908 = vpop.f32.mrf.mxu0
        %v909 = vadd.f32 %v785, %v908
        %v910 = vpop.f32.mrf.mxu0
        %911 = vmatprep.mubr.bf16.mxu0 0
        %912 = vmatmul.mubr.bf16.gmra.mxu0 %v848
        %v913 = vpop.f32.mrf.mxu0
        %v914 = vadd.f32 %v790, %v913
        %v915 = vpop.f32.mrf.mxu0
        %v916 = vpop.f32.mrf.mxu0
        %v917 = vadd.f32 %v793, %v916
        %v918 = vpop.f32.mrf.mxu0
        %919 = vmatprep.mubr.bf16.mxu0 0
        %920 = vmatmul.mubr.bf16.gmra.mxu0 %v851
        %v921 = vpop.f32.mrf.mxu0
        %v922 = vadd.f32 %v798, %v921
        %v923 = vpop.f32.mrf.mxu0
        %v924 = vpop.f32.mrf.mxu0
        %v925 = vadd.f32 %v801, %v924
        %v926 = vpop.f32.mrf.mxu0
        %927 = vmatprep.mubr.bf16.mxu0 0
        %928 = vmatmul.mubr.bf16.gmra.mxu0 %v854
        %v929 = vpop.f32.mrf.mxu0
        %v930 = vadd.f32 %v806, %v929
        %v931 = vpop.f32.mrf.mxu0
        %v932 = vpop.f32.mrf.mxu0
        %v933 = vadd.f32 %v809, %v932
        %v934 = vpop.f32.mrf.mxu0
        %935 = vmatprep.mubr.bf16.mxu0 0
        %936 = vmatmul.mubr.bf16.gmra.mxu0 %v857
        %v937 = vpop.f32.mrf.mxu0
        %v938 = vadd.f32 %v814, %v937
        %v939 = vpop.f32.mrf.mxu0
        %v940 = vpop.f32.mrf.mxu0
        %v941 = vadd.f32 %v817, %v940
        %v942 = vpop.f32.mrf.mxu0
        %943 = vmatprep.mubr.bf16.mxu0 0
        %944 = vmatmul.mubr.bf16.gmra.mxu0 %v860
        %v945 = vpop.f32.mrf.mxu0
        %v946 = vadd.f32 %v822, %v945
        %v947 = vpop.f32.mrf.mxu0
        %v948 = vpop.f32.mrf.mxu0
        %v949 = vadd.f32 %v825, %v948
        %v950 = vpop.f32.mrf.mxu0
        %951 = vmatprep.mubr.bf16.mxu0 0
        %952 = vmatmul.mubr.bf16.gmra.mxu0 %v863
        %v953 = vpop.f32.mrf.mxu0
        %v954 = vadd.f32 %v830, %v953
        %v955 = vpop.f32.mrf.mxu0
        %v956 = vpop.f32.mrf.mxu0
        %v957 = vadd.f32 %v833, %v956
        %v958 = vpop.f32.mrf.mxu0
        %959 = vmatprep.mubr.bf16.mxu0 0
        %960 = vmatmul.mubr.bf16.gmra.mxu0 %v866
        %v961 = vpop.f32.mrf.mxu0
        %v962 = vadd.f32 %v838, %v961
        %v963 = vpop.f32.mrf.mxu0
        %v964 = vpop.f32.mrf.mxu0
        %v965 = vadd.f32 %v841, %v964
        %v966 = vpop.f32.mrf.mxu0
        %967 = vdwg.mxu0
        %v968 = vpack.c.bf16 %v684, %v683
        %v969 = vpack.c.bf16 %v686, %v685
        %v970 = vpack.c.bf16 %v688, %v687
        %v971 = vpack.c.bf16 %v690, %v689
        %v972 = vpack.c.bf16 %v692, %v691
        %v973 = vpack.c.bf16 %v694, %v693
        %v974 = vpack.c.bf16 %v696, %v695
        %v975 = vpack.c.bf16 %v698, %v697
        %s976 = scalar_lea.vmem %s1, 4
        %v977 = vld [vmem:[%s976] sm:$0x3]
        %v979 = vsel %vm718, %v968, 0
        %v982 = vsel %vm718, %v969, 0
        %v985 = vsel %vm718, %v970, 0
        %v988 = vsel %vm718, %v971, 0
        %v991 = vsel %vm718, %v972, 0
        %v994 = vsel %vm718, %v973, 0
        %v997 = vsel %vm718, %v974, 0
        %v1000 = vsel %vm718, %v975, 0
        %v1003 = vsel %vm743, %v977, 0
        %1005 = vmatprep.subr.bf16.mxu0 0
        %1006 = vmatpush1.bf16.msra.mxu0 0
        %1007 = vmatprep.subr.bf16.mxu0 0
        %1008 = vmatpush1.bf16.msra.mxu0 0
        %1009 = vmatprep.subr.bf16.mxu0 0
        %1010 = vmatpush1.bf16.msra.mxu0 0
        %1011 = vmatprep.subr.bf16.mxu0 0
        %1012 = vmatpush1.bf16.msra.mxu0 0
        %1013 = vmatprep.subr.bf16.mxu0 0
        %1014 = vmatpush1.bf16.msra.mxu0 0
        %1015 = vmatprep.subr.bf16.mxu0 0
        %1016 = vmatpush1.bf16.msra.mxu0 0
        %1017 = vmatprep.subr.bf16.mxu0 0
        %1018 = vmatpush1.bf16.msra.mxu0 0
        %1019 = vmatprep.subr.bf16.mxu0 0
        %1020 = vmatpush1.bf16.msra.mxu0 %v1003
        %1021 = vmatprep.subr.bf16.mxu0 0
        %1022 = vmatpush2.bf16.msra.mxu0 0
        %1023 = vmatprep.subr.bf16.mxu0 0
        %1024 = vmatpush2.bf16.msra.mxu0 0
        %1025 = vmatprep.subr.bf16.mxu0 0
        %1026 = vmatpush2.bf16.msra.mxu0 0
        %1027 = vmatprep.subr.bf16.mxu0 0
        %1028 = vmatpush2.bf16.msra.mxu0 0
        %1029 = vmatprep.subr.bf16.mxu0 0
        %1030 = vmatpush2.bf16.msra.mxu0 0
        %1031 = vmatprep.subr.bf16.mxu0 0
        %1032 = vmatpush2.bf16.msra.mxu0 0
        %1033 = vmatprep.subr.bf16.mxu0 0
        %1034 = vmatpush2.bf16.msra.mxu0 0
        %1035 = vmatprep.subr.bf16.mxu0 0
        %1036 = vmatpush2.bf16.msra.mxu0 0
        %1037 = vmatprep.mubr.bf16.mxu0 0
        %1038 = vmatmul.mubr.bf16.gmra.mxu0 %v979
        %v1039 = vpop.f32.mrf.mxu0
        %v1040 = vadd.f32 0.0, %v1039
        %v1041 = vpop.f32.mrf.mxu0
        %v1042 = vpop.f32.mrf.mxu0
        %v1043 = vadd.f32 0.0, %v1042
        %v1044 = vpop.f32.mrf.mxu0
        %1045 = vmatprep.mubr.bf16.mxu0 0
        %1046 = vmatmul.mubr.bf16.gmra.mxu0 %v982
        %v1047 = vpop.f32.mrf.mxu0
        %v1048 = vadd.f32 0.0, %v1047
        %v1049 = vpop.f32.mrf.mxu0
        %v1050 = vpop.f32.mrf.mxu0
        %v1051 = vadd.f32 0.0, %v1050
        %v1052 = vpop.f32.mrf.mxu0
        %1053 = vmatprep.mubr.bf16.mxu0 0
        %1054 = vmatmul.mubr.bf16.gmra.mxu0 %v985
        %v1055 = vpop.f32.mrf.mxu0
        %v1056 = vadd.f32 0.0, %v1055
        %v1057 = vpop.f32.mrf.mxu0
        %v1058 = vpop.f32.mrf.mxu0
        %v1059 = vadd.f32 0.0, %v1058
        %v1060 = vpop.f32.mrf.mxu0
        %1061 = vmatprep.mubr.bf16.mxu0 0
        %1062 = vmatmul.mubr.bf16.gmra.mxu0 %v988
        %v1063 = vpop.f32.mrf.mxu0
        %v1064 = vadd.f32 0.0, %v1063
        %v1065 = vpop.f32.mrf.mxu0
        %v1066 = vpop.f32.mrf.mxu0
        %v1067 = vadd.f32 0.0, %v1066
        %v1068 = vpop.f32.mrf.mxu0
        %1069 = vmatprep.mubr.bf16.mxu0 0
        %1070 = vmatmul.mubr.bf16.gmra.mxu0 %v991
        %v1071 = vpop.f32.mrf.mxu0
        %v1072 = vadd.f32 0.0, %v1071
        %v1073 = vpop.f32.mrf.mxu0
        %v1074 = vpop.f32.mrf.mxu0
        %v1075 = vadd.f32 0.0, %v1074
        %v1076 = vpop.f32.mrf.mxu0
        %1077 = vmatprep.mubr.bf16.mxu0 0
        %1078 = vmatmul.mubr.bf16.gmra.mxu0 %v994
        %v1079 = vpop.f32.mrf.mxu0
        %v1080 = vadd.f32 0.0, %v1079
        %v1081 = vpop.f32.mrf.mxu0
        %v1082 = vpop.f32.mrf.mxu0
        %v1083 = vadd.f32 0.0, %v1082
        %v1084 = vpop.f32.mrf.mxu0
        %1085 = vmatprep.mubr.bf16.mxu0 0
        %1086 = vmatmul.mubr.bf16.gmra.mxu0 %v997
        %v1087 = vpop.f32.mrf.mxu0
        %v1088 = vadd.f32 0.0, %v1087
        %v1089 = vpop.f32.mrf.mxu0
        %v1090 = vpop.f32.mrf.mxu0
        %v1091 = vadd.f32 0.0, %v1090
        %v1092 = vpop.f32.mrf.mxu0
        %1093 = vmatprep.mubr.bf16.mxu0 0
        %1094 = vmatmul.mubr.bf16.gmra.mxu0 %v1000
        %v1095 = vpop.f32.mrf.mxu0
        %v1096 = vadd.f32 0.0, %v1095
        %v1097 = vpop.f32.mrf.mxu0
        %v1098 = vpop.f32.mrf.mxu0
        %v1099 = vadd.f32 0.0, %v1098
        %v1100 = vpop.f32.mrf.mxu0
        %1101 = vdwg.mxu0
        %v1102 = vadd.f32 %v906, %v1040
        %v1103 = vadd.f32 %v909, %v1043
        %v1104 = vadd.f32 %v914, %v1048
        %v1105 = vadd.f32 %v917, %v1051
        %v1106 = vadd.f32 %v922, %v1056
        %v1107 = vadd.f32 %v925, %v1059
        %v1108 = vadd.f32 %v930, %v1064
        %v1109 = vadd.f32 %v933, %v1067
        %v1110 = vadd.f32 %v938, %v1072
        %v1111 = vadd.f32 %v941, %v1075
        %v1112 = vadd.f32 %v946, %v1080
        %v1113 = vadd.f32 %v949, %v1083
        %v1114 = vadd.f32 %v954, %v1088
        %v1115 = vadd.f32 %v957, %v1091
        %v1116 = vadd.f32 %v962, %v1096
        %v1117 = vadd.f32 %v965, %v1099
        %v1118 = vld [vmem:[%s2] sm:$0x1]
        %v1120 = vlaneseq
        %v1121 = vshrl.u32 %v1120, 7
        %v1122 = vsub.s32 0, %v1121
        %v1123 = vrot.slane %v1118, %v1122
        %v1125 = vadd.f32 %v1102, %v1123
        %v1126 = vadd.f32 %v1103, %v1123
        %v1127 = vadd.f32 %v1104, %v1123
        %v1128 = vadd.f32 %v1105, %v1123
        %v1129 = vadd.f32 %v1106, %v1123
        %v1130 = vadd.f32 %v1107, %v1123
        %v1131 = vadd.f32 %v1108, %v1123
        %v1132 = vadd.f32 %v1109, %v1123
        %v1133 = vadd.f32 %v1110, %v1123
        %v1134 = vadd.f32 %v1111, %v1123
        %v1135 = vadd.f32 %v1112, %v1123
        %v1136 = vadd.f32 %v1113, %v1123
        %v1137 = vadd.f32 %v1114, %v1123
        %v1138 = vadd.f32 %v1115, %v1123
        %v1139 = vadd.f32 %v1116, %v1123
        %v1140 = vadd.f32 %v1117, %v1123
        %v1141 = vmax.f32 %v1125, 0.0
        %v1142 = vmax.f32 %v1126, 0.0
        %v1143 = vmax.f32 %v1127, 0.0
        %v1144 = vmax.f32 %v1128, 0.0
        %v1145 = vmax.f32 %v1129, 0.0
        %v1146 = vmax.f32 %v1130, 0.0
        %v1147 = vmax.f32 %v1131, 0.0
        %v1148 = vmax.f32 %v1132, 0.0
        %v1149 = vmax.f32 %v1133, 0.0
        %v1150 = vmax.f32 %v1134, 0.0
        %v1151 = vmax.f32 %v1135, 0.0
        %v1152 = vmax.f32 %v1136, 0.0
        %v1153 = vmax.f32 %v1137, 0.0
        %v1154 = vmax.f32 %v1138, 0.0
        %v1155 = vmax.f32 %v1139, 0.0
        %v1156 = vmax.f32 %v1140, 0.0
        %v1157 = vrot.slane %v1141, 1
        %v1158 = vrot.slane %v1142, 1
        %v1159 = vrot.slane %v1143, 1
        %v1160 = vrot.slane %v1144, 1
        %v1161 = vrot.slane %v1145, 1
        %v1162 = vrot.slane %v1146, 1
        %v1163 = vrot.slane %v1147, 1
        %v1164 = vrot.slane %v1148, 1
        %v1165 = vrot.slane %v1149, 1
        %v1166 = vrot.slane %v1150, 1
        %v1167 = vrot.slane %v1151, 1
        %v1168 = vrot.slane %v1152, 1
        %v1169 = vrot.slane %v1153, 1
        %v1170 = vrot.slane %v1154, 1
        %v1171 = vrot.slane %v1155, 1
        %v1172 = vrot.slane %v1156, 1
        %v1173 = vsel %vm634, %v1171, %v1172
        %v1174 = vsel %vm634, %v1170, %v1171
        %v1175 = vsel %vm634, %v1169, %v1170
        %v1176 = vsel %vm634, %v1168, %v1169
        %v1177 = vsel %vm634, %v1167, %v1168
        %v1178 = vsel %vm634, %v1166, %v1167
        %v1179 = vsel %vm634, %v1165, %v1166
        %v1180 = vsel %vm634, %v1164, %v1165
        %v1181 = vsel %vm634, %v1163, %v1164
        %v1182 = vsel %vm634, %v1162, %v1163
        %v1183 = vsel %vm634, %v1161, %v1162
        %v1184 = vsel %vm634, %v1160, %v1161
        %v1185 = vsel %vm634, %v1159, %v1160
        %v1186 = vsel %vm634, %v1158, %v1159
        %v1187 = vsel %vm634, %v1157, %v1158
        %v1188 = vsel %vm634, %v1172, %v1157
        %v1189 = vmax.f32 %v1141, %v1187
        %v1190 = vmax.f32 %v1142, %v1186
        %v1191 = vmax.f32 %v1143, %v1185
        %v1192 = vmax.f32 %v1144, %v1184
        %v1193 = vmax.f32 %v1145, %v1183
        %v1194 = vmax.f32 %v1146, %v1182
        %v1195 = vmax.f32 %v1147, %v1181
        %v1196 = vmax.f32 %v1148, %v1180
        %v1197 = vmax.f32 %v1149, %v1179
        %v1198 = vmax.f32 %v1150, %v1178
        %v1199 = vmax.f32 %v1151, %v1177
        %v1200 = vmax.f32 %v1152, %v1176
        %v1201 = vmax.f32 %v1153, %v1175
        %v1202 = vmax.f32 %v1154, %v1174
        %v1203 = vmax.f32 %v1155, %v1173
        %v1204 = vmax.f32 %v1156, %v1188
        %vm1205 = vcmask 64512
        %1206 = vst.msk [vmem:[#allocation2] sm:$0xff] %vm1205, %v1189
        %1207 = vst.msk [vmem:[#allocation2 + $0x8] sm:$0xff] %vm1205, %v1190
        %1208 = vst.msk [vmem:[#allocation2 + $0x10] sm:$0xff] %vm1205, %v1191
        %1209 = vst.msk [vmem:[#allocation2 + $0x18] sm:$0xff] %vm1205, %v1192
        %1210 = vst.msk [vmem:[#allocation2 + $0x20] sm:$0xff] %vm1205, %v1193
        %1211 = vst.msk [vmem:[#allocation2 + $0x28] sm:$0xff] %vm1205, %v1194
        %1212 = vst.msk [vmem:[#allocation2 + $0x30] sm:$0xff] %vm1205, %v1195
        %1213 = vst.msk [vmem:[#allocation2 + $0x38] sm:$0xff] %vm1205, %v1196
        %1214 = vst.msk [vmem:[#allocation2 + $0x40] sm:$0xff] %vm1205, %v1197
        %1215 = vst.msk [vmem:[#allocation2 + $0x48] sm:$0xff] %vm1205, %v1198
        %1216 = vst.msk [vmem:[#allocation2 + $0x50] sm:$0xff] %vm1205, %v1199
        %1217 = vst.msk [vmem:[#allocation2 + $0x58] sm:$0xff] %vm1205, %v1200
        %1218 = vst.msk [vmem:[#allocation2 + $0x60] sm:$0xff] %vm1205, %v1201
        %1219 = vst.msk [vmem:[#allocation2 + $0x68] sm:$0xff] %vm1205, %v1202
        %1220 = vst.msk [vmem:[#allocation2 + $0x70] sm:$0xff] %vm1205, %v1203
        %1221 = vst.msk [vmem:[#allocation2 + $0x78] sm:$0xff] %vm1205, %v1204
        %v1222 = vld [vmem:[#allocation2] ss:$2 sm:$0xff]
        %s1223 = scalar_lea.vmem [#allocation2], 16
        %v1224 = vld [vmem:[%s1223] ss:$2 sm:$0xff]
        %s1225 = scalar_lea.vmem [#allocation2], 32
        %v1226 = vld [vmem:[%s1225] ss:$2 sm:$0xff]
        %s1227 = scalar_lea.vmem [#allocation2], 48
        %v1228 = vld [vmem:[%s1227] ss:$2 sm:$0xff]
        %s1229 = scalar_lea.vmem [#allocation2], 64
        %v1230 = vld [vmem:[%s1229] ss:$2 sm:$0xff]
        %s1231 = scalar_lea.vmem [#allocation2], 80
        %v1232 = vld [vmem:[%s1231] ss:$2 sm:$0xff]
        %s1233 = scalar_lea.vmem [#allocation2], 96
        %v1234 = vld [vmem:[%s1233] ss:$2 sm:$0xff]
        %s1235 = scalar_lea.vmem [#allocation2], 112
        %v1236 = vld [vmem:[%s1235] ss:$2 sm:$0xff]
        %vm1237 = vcmp.lt.s32.totalorder %v297, 0
        %v1238 = vsub.s32 0, %v297
        %v1239 = vsel %vm1237, %v1238, %v297
        %v1240 = vshrl.u32 %v1239, 3
        %v1241 = vand.u32 %v1239, 7
        %v1242 = vsub.s32 0, %v1241
        %v1243 = vsel %vm1237, %v1242, %v1241
        %vm1244 = vcmp.lt.s32.totalorder %v298, 0
        %v1245 = vsub.s32 0, %v298
        %v1246 = vsel %vm1244, %v1245, %v298
        %v1247 = vshrl.u32 %v1246, 3
        %v1248 = vand.u32 %v1246, 7
        %v1249 = vsub.s32 0, %v1248
        %v1250 = vsel %vm1244, %v1249, %v1248
        %vm1251 = vcmp.lt.s32.totalorder %v299, 0
        %v1252 = vsub.s32 0, %v299
        %v1253 = vsel %vm1251, %v1252, %v299
        %v1254 = vshrl.u32 %v1253, 3
        %v1255 = vand.u32 %v1253, 7
        %v1256 = vsub.s32 0, %v1255
        %v1257 = vsel %vm1251, %v1256, %v1255
        %vm1258 = vcmp.lt.s32.totalorder %v300, 0
        %v1259 = vsub.s32 0, %v300
        %v1260 = vsel %vm1258, %v1259, %v300
        %v1261 = vshrl.u32 %v1260, 3
        %v1262 = vand.u32 %v1260, 7
        %v1263 = vsub.s32 0, %v1262
        %v1264 = vsel %vm1258, %v1263, %v1262
        %vm1265 = vcmp.lt.s32.totalorder %v301, 0
        %v1266 = vsub.s32 0, %v301
        %v1267 = vsel %vm1265, %v1266, %v301
        %v1268 = vshrl.u32 %v1267, 3
        %v1269 = vand.u32 %v1267, 7
        %v1270 = vsub.s32 0, %v1269
        %v1271 = vsel %vm1265, %v1270, %v1269
        %vm1272 = vcmp.lt.s32.totalorder %v302, 0
        %v1273 = vsub.s32 0, %v302
        %v1274 = vsel %vm1272, %v1273, %v302
        %v1275 = vshrl.u32 %v1274, 3
        %v1276 = vand.u32 %v1274, 7
        %v1277 = vsub.s32 0, %v1276
        %v1278 = vsel %vm1272, %v1277, %v1276
        %vm1279 = vcmp.lt.s32.totalorder %v303, 0
        %v1280 = vsub.s32 0, %v303
        %v1281 = vsel %vm1279, %v1280, %v303
        %v1282 = vshrl.u32 %v1281, 3
        %v1283 = vand.u32 %v1281, 7
        %v1284 = vsub.s32 0, %v1283
        %v1285 = vsel %vm1279, %v1284, %v1283
        %vm1286 = vcmp.lt.s32.totalorder %v304, 0
        %v1287 = vsub.s32 0, %v304
        %v1288 = vsel %vm1286, %v1287, %v304
        %v1289 = vshrl.u32 %v1288, 3
        %v1290 = vand.u32 %v1288, 7
        %v1291 = vsub.s32 0, %v1290
        %v1292 = vsel %vm1286, %v1291, %v1290
        %vm1293 = vcmp.ne.s32.totalorder %v1243, 0
        %vm1294 = vcmp.ne.s32.totalorder %v1250, 0
        %vm1295 = vcmp.ne.s32.totalorder %v1257, 0
        %vm1296 = vcmp.ne.s32.totalorder %v1264, 0
        %vm1297 = vcmp.ne.s32.totalorder %v1271, 0
        %vm1298 = vcmp.ne.s32.totalorder %v1278, 0
        %vm1299 = vcmp.ne.s32.totalorder %v1285, 0
        %vm1300 = vcmp.ne.s32.totalorder %v1292, 0
        %vm1301 = vcmp.lt.s32.totalorder %v1243, 0
        %vm1302 = vcmp.lt.s32.totalorder %v1250, 0
        %vm1303 = vcmp.lt.s32.totalorder %v1257, 0
        %vm1304 = vcmp.lt.s32.totalorder %v1264, 0
        %vm1305 = vcmp.lt.s32.totalorder %v1271, 0
        %vm1306 = vcmp.lt.s32.totalorder %v1278, 0
        %vm1307 = vcmp.lt.s32.totalorder %v1285, 0
        %vm1308 = vcmp.lt.s32.totalorder %v1292, 0
        %vm1309 = vmand %vm1301, %vm1293
        %vm1310 = vmand %vm1302, %vm1294
        %vm1311 = vmand %vm1303, %vm1295
        %vm1312 = vmand %vm1304, %vm1296
        %vm1313 = vmand %vm1305, %vm1297
        %vm1314 = vmand %vm1306, %vm1298
        %vm1315 = vmand %vm1307, %vm1299
        %vm1316 = vmand %vm1308, %vm1300
        %v1317 = vadd.s32 %v1243, 8
        %v1318 = vadd.s32 %v1250, 8
        %v1319 = vadd.s32 %v1257, 8
        %v1320 = vadd.s32 %v1264, 8
        %v1321 = vadd.s32 %v1271, 8
        %v1322 = vadd.s32 %v1278, 8
        %v1323 = vadd.s32 %v1285, 8
        %v1324 = vadd.s32 %v1292, 8
        %v1325 = vsel %vm1309, %v1317, %v1243
        %v1326 = vsel %vm1310, %v1318, %v1250
        %v1327 = vsel %vm1311, %v1319, %v1257
        %v1328 = vsel %vm1312, %v1320, %v1264
        %v1329 = vsel %vm1313, %v1321, %v1271
        %v1330 = vsel %vm1314, %v1322, %v1278
        %v1331 = vsel %vm1315, %v1323, %v1285
        %v1332 = vsel %vm1316, %v1324, %v1292
        %vm1333 = vcmp.eq.s32.totalorder %v1325, 0
        %vm1334 = vcmp.eq.s32.totalorder %v1326, 0
        %vm1335 = vcmp.eq.s32.totalorder %v1327, 0
        %vm1336 = vcmp.eq.s32.totalorder %v1328, 0
        %vm1337 = vcmp.eq.s32.totalorder %v1329, 0
        %vm1338 = vcmp.eq.s32.totalorder %v1330, 0
        %vm1339 = vcmp.eq.s32.totalorder %v1331, 0
        %vm1340 = vcmp.eq.s32.totalorder %v1332, 0
        %v1341 = vrot.slane %v1222, 7
        %v1342 = vrot.slane %v1224, 7
        %v1343 = vrot.slane %v1226, 7
        %v1344 = vrot.slane %v1228, 7
        %v1345 = vrot.slane %v1230, 7
        %v1346 = vrot.slane %v1232, 7
        %v1347 = vrot.slane %v1234, 7
        %v1348 = vrot.slane %v1236, 7
        %v1349 = vsel %vm537, %v1347, %v1348
        %v1350 = vsel %vm537, %v1346, %v1347
        %v1351 = vsel %vm537, %v1345, %v1346
        %v1352 = vsel %vm537, %v1344, %v1345
        %v1353 = vsel %vm537, %v1343, %v1344
        %v1354 = vsel %vm537, %v1342, %v1343
        %v1355 = vsel %vm537, %v1341, %v1342
        %v1356 = vsel %vm537, %v1348, %v1341
        %v1357 = vsel %vm1333, 1, 0
        %v1358 = vsel %vm1334, 1, 0
        %v1359 = vsel %vm1335, 1, 0
        %v1360 = vsel %vm1336, 1, 0
        %v1361 = vsel %vm1337, 1, 0
        %v1362 = vsel %vm1338, 1, 0
        %v1363 = vsel %vm1339, 1, 0
        %v1364 = vsel %vm1340, 1, 0
        %vm1365 = vcmp.eq.s32.totalorder %v1357, 1
        %vm1366 = vcmp.eq.s32.totalorder %v1358, 1
        %vm1367 = vcmp.eq.s32.totalorder %v1359, 1
        %vm1368 = vcmp.eq.s32.totalorder %v1360, 1
        %vm1369 = vcmp.eq.s32.totalorder %v1361, 1
        %vm1370 = vcmp.eq.s32.totalorder %v1362, 1
        %vm1371 = vcmp.eq.s32.totalorder %v1363, 1
        %vm1372 = vcmp.eq.s32.totalorder %v1364, 1
        %v1373 = vsel %vm1365, 0.0, %v1356
        %v1374 = vsel %vm1366, 0.0, %v1355
        %v1375 = vsel %vm1367, 0.0, %v1354
        %v1376 = vsel %vm1368, 0.0, %v1353
        %v1377 = vsel %vm1369, 0.0, %v1352
        %v1378 = vsel %vm1370, 0.0, %v1351
        %v1379 = vsel %vm1371, 0.0, %v1350
        %v1380 = vsel %vm1372, 0.0, %v1349
        %vm1381 = vcmp.eq.s32.totalorder %v1325, 7
        %vm1382 = vcmp.eq.s32.totalorder %v1326, 7
        %vm1383 = vcmp.eq.s32.totalorder %v1327, 7
        %vm1384 = vcmp.eq.s32.totalorder %v1328, 7
        %vm1385 = vcmp.eq.s32.totalorder %v1329, 7
        %vm1386 = vcmp.eq.s32.totalorder %v1330, 7
        %vm1387 = vcmp.eq.s32.totalorder %v1331, 7
        %vm1388 = vcmp.eq.s32.totalorder %v1332, 7
        %v1389 = vrot.slane %v1222, 1
        %v1390 = vrot.slane %v1224, 1
        %v1391 = vrot.slane %v1226, 1
        %v1392 = vrot.slane %v1228, 1
        %v1393 = vrot.slane %v1230, 1
        %v1394 = vrot.slane %v1232, 1
        %v1395 = vrot.slane %v1234, 1
        %v1396 = vrot.slane %v1236, 1
        %v1397 = vsel %vm634, %v1395, %v1396
        %v1398 = vsel %vm634, %v1394, %v1395
        %v1399 = vsel %vm634, %v1393, %v1394
        %v1400 = vsel %vm634, %v1392, %v1393
        %v1401 = vsel %vm634, %v1391, %v1392
        %v1402 = vsel %vm634, %v1390, %v1391
        %v1403 = vsel %vm634, %v1389, %v1390
        %v1404 = vsel %vm634, %v1396, %v1389
        %v1405 = vsel %vm1381, 1, 0
        %v1406 = vsel %vm1382, 1, 0
        %v1407 = vsel %vm1383, 1, 0
        %v1408 = vsel %vm1384, 1, 0
        %v1409 = vsel %vm1385, 1, 0
        %v1410 = vsel %vm1386, 1, 0
        %v1411 = vsel %vm1387, 1, 0
        %v1412 = vsel %vm1388, 1, 0
        %vm1413 = vcmp.eq.s32.totalorder %v1405, 1
        %vm1414 = vcmp.eq.s32.totalorder %v1406, 1
        %vm1415 = vcmp.eq.s32.totalorder %v1407, 1
        %vm1416 = vcmp.eq.s32.totalorder %v1408, 1
        %vm1417 = vcmp.eq.s32.totalorder %v1409, 1
        %vm1418 = vcmp.eq.s32.totalorder %v1410, 1
        %vm1419 = vcmp.eq.s32.totalorder %v1411, 1
        %vm1420 = vcmp.eq.s32.totalorder %v1412, 1
        %v1421 = vsel %vm1413, 0.0, %v1403
        %v1422 = vsel %vm1414, 0.0, %v1402
        %v1423 = vsel %vm1415, 0.0, %v1401
        %v1424 = vsel %vm1416, 0.0, %v1400
        %v1425 = vsel %vm1417, 0.0, %v1399
        %v1426 = vsel %vm1418, 0.0, %v1398
        %v1427 = vsel %vm1419, 0.0, %v1397
        %v1428 = vsel %vm1420, 0.0, %v1404
        %v1429 = vpack.c.bf16 %v1224, %v1222
        %v1430 = vpack.c.bf16 %v1228, %v1226
        %v1431 = vpack.c.bf16 %v1232, %v1230
        %v1432 = vpack.c.bf16 %v1236, %v1234
        %s1433 = scalar_lea.vmem %s3, 4
        %v1434 = vld [vmem:[%s1433] sm:$0xf]
        %v1435 = vpack.c.bf16 %v1374, %v1373
        %v1436 = vpack.c.bf16 %v1376, %v1375
        %v1437 = vpack.c.bf16 %v1378, %v1377
        %v1438 = vpack.c.bf16 %v1380, %v1379
        %v1439 = vld [vmem:[%s3] sm:$0xf]
        %v1441 = vsel %vm1205, %v1435, 0
        %v1444 = vsel %vm1205, %v1436, 0
        %v1447 = vsel %vm1205, %v1437, 0
        %v1450 = vsel %vm1205, %v1438, 0
        %vm1452 = vcmask 1043456
        %v1454 = vsel %vm1452, %v1439, 0
        %1456 = vmatprep.subr.bf16.mxu0 0
        %1457 = vmatpush1.bf16.msra.mxu0 0
        %1458 = vmatprep.subr.bf16.mxu0 0
        %1459 = vmatpush1.bf16.msra.mxu0 0
        %1460 = vmatprep.subr.bf16.mxu0 0
        %1461 = vmatpush1.bf16.msra.mxu0 0
        %1462 = vmatprep.subr.bf16.mxu0 0
        %1463 = vmatpush1.bf16.msra.mxu0 0
        %1464 = vmatprep.subr.bf16.mxu0 0
        %1465 = vmatpush1.bf16.msra.mxu0 0
        %1466 = vmatprep.subr.bf16.mxu0 0
        %1467 = vmatpush1.bf16.msra.mxu0 0
        %1468 = vmatprep.subr.bf16.mxu0 0
        %1469 = vmatpush1.bf16.msra.mxu0 0
        %1470 = vmatprep.subr.bf16.mxu0 0
        %1471 = vmatpush1.bf16.msra.mxu0 %v1454
        %1472 = vmatprep.subr.bf16.mxu0 0
        %1473 = vmatpush2.bf16.msra.mxu0 0
        %1474 = vmatprep.subr.bf16.mxu0 0
        %1475 = vmatpush2.bf16.msra.mxu0 0
        %1476 = vmatprep.subr.bf16.mxu0 0
        %1477 = vmatpush2.bf16.msra.mxu0 0
        %1478 = vmatprep.subr.bf16.mxu0 0
        %1479 = vmatpush2.bf16.msra.mxu0 0
        %1480 = vmatprep.subr.bf16.mxu0 0
        %1481 = vmatpush2.bf16.msra.mxu0 0
        %1482 = vmatprep.subr.bf16.mxu0 0
        %1483 = vmatpush2.bf16.msra.mxu0 0
        %1484 = vmatprep.subr.bf16.mxu0 0
        %1485 = vmatpush2.bf16.msra.mxu0 0
        %1486 = vmatprep.subr.bf16.mxu0 0
        %1487 = vmatpush2.bf16.msra.mxu0 0
        %1488 = vmatprep.mubr.bf16.mxu0 0
        %1489 = vmatmul.mubr.bf16.gmra.mxu0 %v1441
        %v1490 = vpop.f32.mrf.mxu0
        %v1491 = vadd.f32 0.0, %v1490
        %v1492 = vpop.f32.mrf.mxu0
        %v1493 = vpop.f32.mrf.mxu0
        %v1494 = vadd.f32 0.0, %v1493
        %v1495 = vpop.f32.mrf.mxu0
        %1496 = vmatprep.mubr.bf16.mxu0 0
        %1497 = vmatmul.mubr.bf16.gmra.mxu0 %v1444
        %v1498 = vpop.f32.mrf.mxu0
        %v1499 = vadd.f32 0.0, %v1498
        %v1500 = vpop.f32.mrf.mxu0
        %v1501 = vpop.f32.mrf.mxu0
        %v1502 = vadd.f32 0.0, %v1501
        %v1503 = vpop.f32.mrf.mxu0
        %1504 = vmatprep.mubr.bf16.mxu0 0
        %1505 = vmatmul.mubr.bf16.gmra.mxu0 %v1447
        %v1506 = vpop.f32.mrf.mxu0
        %v1507 = vadd.f32 0.0, %v1506
        %v1508 = vpop.f32.mrf.mxu0
        %v1509 = vpop.f32.mrf.mxu0
        %v1510 = vadd.f32 0.0, %v1509
        %v1511 = vpop.f32.mrf.mxu0
        %1512 = vmatprep.mubr.bf16.mxu0 0
        %1513 = vmatmul.mubr.bf16.gmra.mxu0 %v1450
        %v1514 = vpop.f32.mrf.mxu0
        %v1515 = vadd.f32 0.0, %v1514
        %v1516 = vpop.f32.mrf.mxu0
        %v1517 = vpop.f32.mrf.mxu0
        %v1518 = vadd.f32 0.0, %v1517
        %v1519 = vpop.f32.mrf.mxu0
        %1520 = vdwg.mxu0
        %v1522 = vsel %vm1205, %v1429, 0
        %v1525 = vsel %vm1205, %v1430, 0
        %v1528 = vsel %vm1205, %v1431, 0
        %v1531 = vsel %vm1205, %v1432, 0
        %v1534 = vsel %vm1452, %v1434, 0
        %1536 = vmatprep.subr.bf16.mxu0 0
        %1537 = vmatpush1.bf16.msra.mxu0 0
        %1538 = vmatprep.subr.bf16.mxu0 0
        %1539 = vmatpush1.bf16.msra.mxu0 0
        %1540 = vmatprep.subr.bf16.mxu0 0
        %1541 = vmatpush1.bf16.msra.mxu0 0
        %1542 = vmatprep.subr.bf16.mxu0 0
        %1543 = vmatpush1.bf16.msra.mxu0 0
        %1544 = vmatprep.subr.bf16.mxu0 0
        %1545 = vmatpush1.bf16.msra.mxu0 0
        %1546 = vmatprep.subr.bf16.mxu0 0
        %1547 = vmatpush1.bf16.msra.mxu0 0
        %1548 = vmatprep.subr.bf16.mxu0 0
        %1549 = vmatpush1.bf16.msra.mxu0 0
        %1550 = vmatprep.subr.bf16.mxu0 0
        %1551 = vmatpush1.bf16.msra.mxu0 %v1534
        %1552 = vmatprep.subr.bf16.mxu0 0
        %1553 = vmatpush2.bf16.msra.mxu0 0
        %1554 = vmatprep.subr.bf16.mxu0 0
        %1555 = vmatpush2.bf16.msra.mxu0 0
        %1556 = vmatprep.subr.bf16.mxu0 0
        %1557 = vmatpush2.bf16.msra.mxu0 0
        %1558 = vmatprep.subr.bf16.mxu0 0
        %1559 = vmatpush2.bf16.msra.mxu0 0
        %1560 = vmatprep.subr.bf16.mxu0 0
        %1561 = vmatpush2.bf16.msra.mxu0 0
        %1562 = vmatprep.subr.bf16.mxu0 0
        %1563 = vmatpush2.bf16.msra.mxu0 0
        %1564 = vmatprep.subr.bf16.mxu0 0
        %1565 = vmatpush2.bf16.msra.mxu0 0
        %1566 = vmatprep.subr.bf16.mxu0 0
        %1567 = vmatpush2.bf16.msra.mxu0 0
        %1568 = vmatprep.mubr.bf16.mxu0 0
        %1569 = vmatmul.mubr.bf16.gmra.mxu0 %v1522
        %v1570 = vpop.f32.mrf.mxu0
        %v1571 = vadd.f32 %v1491, %v1570
        %v1572 = vpop.f32.mrf.mxu0
        %v1573 = vpop.f32.mrf.mxu0
        %v1574 = vadd.f32 %v1494, %v1573
        %v1575 = vpop.f32.mrf.mxu0
        %1576 = vmatprep.mubr.bf16.mxu0 0
        %1577 = vmatmul.mubr.bf16.gmra.mxu0 %v1525
        %v1578 = vpop.f32.mrf.mxu0
        %v1579 = vadd.f32 %v1499, %v1578
        %v1580 = vpop.f32.mrf.mxu0
        %v1581 = vpop.f32.mrf.mxu0
        %v1582 = vadd.f32 %v1502, %v1581
        %v1583 = vpop.f32.mrf.mxu0
        %1584 = vmatprep.mubr.bf16.mxu0 0
        %1585 = vmatmul.mubr.bf16.gmra.mxu0 %v1528
        %v1586 = vpop.f32.mrf.mxu0
        %v1587 = vadd.f32 %v1507, %v1586
        %v1588 = vpop.f32.mrf.mxu0
        %v1589 = vpop.f32.mrf.mxu0
        %v1590 = vadd.f32 %v1510, %v1589
        %v1591 = vpop.f32.mrf.mxu0
        %1592 = vmatprep.mubr.bf16.mxu0 0
        %1593 = vmatmul.mubr.bf16.gmra.mxu0 %v1531
        %v1594 = vpop.f32.mrf.mxu0
        %v1595 = vadd.f32 %v1515, %v1594
        %v1596 = vpop.f32.mrf.mxu0
        %v1597 = vpop.f32.mrf.mxu0
        %v1598 = vadd.f32 %v1518, %v1597
        %v1599 = vpop.f32.mrf.mxu0
        %1600 = vdwg.mxu0
        %v1601 = vpack.c.bf16 %v1422, %v1421
        %v1602 = vpack.c.bf16 %v1424, %v1423
        %v1603 = vpack.c.bf16 %v1426, %v1425
        %v1604 = vpack.c.bf16 %v1428, %v1427
        %s1605 = scalar_lea.vmem %s3, 8
        %v1606 = vld [vmem:[%s1605] sm:$0xf]
        %v1608 = vsel %vm1205, %v1601, 0
        %v1611 = vsel %vm1205, %v1602, 0
        %v1614 = vsel %vm1205, %v1603, 0
        %v1617 = vsel %vm1205, %v1604, 0
        %v1620 = vsel %vm1452, %v1606, 0
        %1622 = vmatprep.subr.bf16.mxu0 0
        %1623 = vmatpush1.bf16.msra.mxu0 0
        %1624 = vmatprep.subr.bf16.mxu0 0
        %1625 = vmatpush1.bf16.msra.mxu0 0
        %1626 = vmatprep.subr.bf16.mxu0 0
        %1627 = vmatpush1.bf16.msra.mxu0 0
        %1628 = vmatprep.subr.bf16.mxu0 0
        %1629 = vmatpush1.bf16.msra.mxu0 0
        %1630 = vmatprep.subr.bf16.mxu0 0
        %1631 = vmatpush1.bf16.msra.mxu0 0
        %1632 = vmatprep.subr.bf16.mxu0 0
        %1633 = vmatpush1.bf16.msra.mxu0 0
        %1634 = vmatprep.subr.bf16.mxu0 0
        %1635 = vmatpush1.bf16.msra.mxu0 0
        %1636 = vmatprep.subr.bf16.mxu0 0
        %1637 = vmatpush1.bf16.msra.mxu0 %v1620
        %1638 = vmatprep.subr.bf16.mxu0 0
        %1639 = vmatpush2.bf16.msra.mxu0 0
        %1640 = vmatprep.subr.bf16.mxu0 0
        %1641 = vmatpush2.bf16.msra.mxu0 0
        %1642 = vmatprep.subr.bf16.mxu0 0
        %1643 = vmatpush2.bf16.msra.mxu0 0
        %1644 = vmatprep.subr.bf16.mxu0 0
        %1645 = vmatpush2.bf16.msra.mxu0 0
        %1646 = vmatprep.subr.bf16.mxu0 0
        %1647 = vmatpush2.bf16.msra.mxu0 0
        %1648 = vmatprep.subr.bf16.mxu0 0
        %1649 = vmatpush2.bf16.msra.mxu0 0
        %1650 = vmatprep.subr.bf16.mxu0 0
        %1651 = vmatpush2.bf16.msra.mxu0 0
        %1652 = vmatprep.subr.bf16.mxu0 0
        %1653 = vmatpush2.bf16.msra.mxu0 0
        %1654 = vmatprep.mubr.bf16.mxu0 0
        %1655 = vmatmul.mubr.bf16.gmra.mxu0 %v1608
        %v1656 = vpop.f32.mrf.mxu0
        %v1657 = vadd.f32 0.0, %v1656
        %v1658 = vpop.f32.mrf.mxu0
        %v1659 = vpop.f32.mrf.mxu0
        %v1660 = vadd.f32 0.0, %v1659
        %v1661 = vpop.f32.mrf.mxu0
        %1662 = vmatprep.mubr.bf16.mxu0 0
        %1663 = vmatmul.mubr.bf16.gmra.mxu0 %v1611
        %v1664 = vpop.f32.mrf.mxu0
        %v1665 = vadd.f32 0.0, %v1664
        %v1666 = vpop.f32.mrf.mxu0
        %v1667 = vpop.f32.mrf.mxu0
        %v1668 = vadd.f32 0.0, %v1667
        %v1669 = vpop.f32.mrf.mxu0
        %1670 = vmatprep.mubr.bf16.mxu0 0
        %1671 = vmatmul.mubr.bf16.gmra.mxu0 %v1614
        %v1672 = vpop.f32.mrf.mxu0
        %v1673 = vadd.f32 0.0, %v1672
        %v1674 = vpop.f32.mrf.mxu0
        %v1675 = vpop.f32.mrf.mxu0
        %v1676 = vadd.f32 0.0, %v1675
        %v1677 = vpop.f32.mrf.mxu0
        %1678 = vmatprep.mubr.bf16.mxu0 0
        %1679 = vmatmul.mubr.bf16.gmra.mxu0 %v1617
        %v1680 = vpop.f32.mrf.mxu0
        %v1681 = vadd.f32 0.0, %v1680
        %v1682 = vpop.f32.mrf.mxu0
        %v1683 = vpop.f32.mrf.mxu0
        %v1684 = vadd.f32 0.0, %v1683
        %v1685 = vpop.f32.mrf.mxu0
        %1686 = vdwg.mxu0
        %v1687 = vadd.f32 %v1571, %v1657
        %v1688 = vadd.f32 %v1574, %v1660
        %v1689 = vadd.f32 %v1579, %v1665
        %v1690 = vadd.f32 %v1582, %v1668
        %v1691 = vadd.f32 %v1587, %v1673
        %v1692 = vadd.f32 %v1590, %v1676
        %v1693 = vadd.f32 %v1595, %v1681
        %v1694 = vadd.f32 %v1598, %v1684
        %v1695 = vld [vmem:[%s4] sm:$0x1]
        %v1697 = vlaneseq
        %v1698 = vshrl.u32 %v1697, 7
        %v1699 = vsub.s32 0, %v1698
        %v1700 = vrot.slane %v1695, %v1699
        %v1702 = vadd.f32 %v1687, %v1700
        %v1703 = vadd.f32 %v1688, %v1700
        %v1704 = vadd.f32 %v1689, %v1700
        %v1705 = vadd.f32 %v1690, %v1700
        %v1706 = vadd.f32 %v1691, %v1700
        %v1707 = vadd.f32 %v1692, %v1700
        %v1708 = vadd.f32 %v1693, %v1700
        %v1709 = vadd.f32 %v1694, %v1700
        %v1710 = vmax.f32 %v1702, 0.0
        %v1711 = vmax.f32 %v1703, 0.0
        %v1712 = vmax.f32 %v1704, 0.0
        %v1713 = vmax.f32 %v1705, 0.0
        %v1714 = vmax.f32 %v1706, 0.0
        %v1715 = vmax.f32 %v1707, 0.0
        %v1716 = vmax.f32 %v1708, 0.0
        %v1717 = vmax.f32 %v1709, 0.0
        %v1718 = vrot.slane %v1710, 1
        %v1719 = vrot.slane %v1711, 1
        %v1720 = vrot.slane %v1712, 1
        %v1721 = vrot.slane %v1713, 1
        %v1722 = vrot.slane %v1714, 1
        %v1723 = vrot.slane %v1715, 1
        %v1724 = vrot.slane %v1716, 1
        %v1725 = vrot.slane %v1717, 1
        %v1726 = vsel %vm634, %v1724, %v1725
        %v1727 = vsel %vm634, %v1723, %v1724
        %v1728 = vsel %vm634, %v1722, %v1723
        %v1729 = vsel %vm634, %v1721, %v1722
        %v1730 = vsel %vm634, %v1720, %v1721
        %v1731 = vsel %vm634, %v1719, %v1720
        %v1732 = vsel %vm634, %v1718, %v1719
        %v1733 = vsel %vm634, %v1725, %v1718
        %v1734 = vmax.f32 %v1710, %v1732
        %v1735 = vmax.f32 %v1711, %v1731
        %v1736 = vmax.f32 %v1712, %v1730
        %v1737 = vmax.f32 %v1713, %v1729
        %v1738 = vmax.f32 %v1714, %v1728
        %v1739 = vmax.f32 %v1715, %v1727
        %v1740 = vmax.f32 %v1716, %v1726
        %v1741 = vmax.f32 %v1717, %v1733
        %vm1742 = vcmask 130048
        %1743 = vst.msk [vmem:[#allocation2] sm:$0xff] %vm1742, %v1734
        %1744 = vst.msk [vmem:[#allocation2 + $0x8] sm:$0xff] %vm1742, %v1735
        %1745 = vst.msk [vmem:[#allocation2 + $0x10] sm:$0xff] %vm1742, %v1736
        %1746 = vst.msk [vmem:[#allocation2 + $0x18] sm:$0xff] %vm1742, %v1737
        %1747 = vst.msk [vmem:[#allocation2 + $0x20] sm:$0xff] %vm1742, %v1738
        %1748 = vst.msk [vmem:[#allocation2 + $0x28] sm:$0xff] %vm1742, %v1739
        %1749 = vst.msk [vmem:[#allocation2 + $0x30] sm:$0xff] %vm1742, %v1740
        %1750 = vst.msk [vmem:[#allocation2 + $0x38] sm:$0xff] %vm1742, %v1741
        %v1751 = vld [vmem:[#allocation2] ss:$8 sm:$0xf]
        %v1752 = vld [vmem:[#allocation2] ss:$8 sm:$0xf0]
        %v1753 = vor.u32 %v1751, %v1752
        %v1754 = vpack.c.bf16 %v1753, %v1753
        %v1755 = vld [vmem:[%s5] sm:$0xf]
        %v1756 = vld [vmem:[%s5 + $0x4] sm:$0xf]
        %s1757 = scalar_lea.vmem [#allocation2], 2
        %v1758 = vld [vmem:[%s1757] ss:$8 sm:$0xf]
        %v1759 = vld [vmem:[%s1757] ss:$8 sm:$0xf0]
        %v1760 = vor.u32 %v1758, %v1759
        %v1761 = vpack.c.bf16 %v1760, %v1760
        %s1762 = scalar_lea.vmem %s5, 8
        %v1763 = vld [vmem:[%s1762] sm:$0xf]
        %v1764 = vld [vmem:[%s1762 + $0x4] sm:$0xf]
        %v1767 = vunpack.c.l.b16 %v1763
        %v1768 = vunpack.c.l.b16 %v1764
        %v1769 = vpack.c.b16 %v1768, %v1767
        %v1772 = vsel %vm1742, %v1761, 0
        %1774 = vmatprep.subr.bf16.mxu0 0
        %1775 = vmatpush1.bf16.msra.mxu0 0
        %1776 = vmatprep.subr.bf16.mxu0 0
        %1777 = vmatpush1.bf16.msra.mxu0 0
        %1778 = vmatprep.subr.bf16.mxu0 0
        %1779 = vmatpush1.bf16.msra.mxu0 0
        %1780 = vmatprep.subr.bf16.mxu0 0
        %1781 = vmatpush1.bf16.msra.mxu0 0
        %1782 = vmatprep.subr.bf16.mxu0 0
        %1783 = vmatpush1.bf16.msra.mxu0 0
        %1784 = vmatprep.subr.bf16.mxu0 0
        %1785 = vmatpush1.bf16.msra.mxu0 0
        %1786 = vmatprep.subr.bf16.mxu0 0
        %1787 = vmatpush1.bf16.msra.mxu0 0
        %1788 = vmatprep.subr.bf16.mxu0 0
        %1789 = vmatpush1.bf16.msra.mxu0 %v1769
        %1790 = vmatprep.subr.bf16.mxu0 0
        %1791 = vmatpush2.bf16.msra.mxu0 0
        %1792 = vmatprep.subr.bf16.mxu0 0
        %1793 = vmatpush2.bf16.msra.mxu0 0
        %1794 = vmatprep.subr.bf16.mxu0 0
        %1795 = vmatpush2.bf16.msra.mxu0 0
        %1796 = vmatprep.subr.bf16.mxu0 0
        %1797 = vmatpush2.bf16.msra.mxu0 0
        %1798 = vmatprep.subr.bf16.mxu0 0
        %1799 = vmatpush2.bf16.msra.mxu0 0
        %1800 = vmatprep.subr.bf16.mxu0 0
        %1801 = vmatpush2.bf16.msra.mxu0 0
        %1802 = vmatprep.subr.bf16.mxu0 0
        %1803 = vmatpush2.bf16.msra.mxu0 0
        %1804 = vmatprep.subr.bf16.mxu0 0
        %1805 = vmatpush2.bf16.msra.mxu0 0
        %1806 = vmatprep.mubr.bf16.mxu0 0
        %1807 = vmatmul.mubr.bf16.gmra.mxu0 %v1772
        %v1808 = vpop.f32.mrf.mxu0
        %v1809 = vadd.f32 0.0, %v1808
        %v1810 = vpop.f32.mrf.mxu0
        %v1811 = vpop.f32.mrf.mxu0
        %v1812 = vpop.f32.mrf.mxu0
        %1813 = vdwg.mxu0
        %v1816 = vunpack.c.l.b16 %v1755
        %v1817 = vunpack.c.l.b16 %v1756
        %v1818 = vpack.c.b16 %v1817, %v1816
        %v1821 = vsel %vm1742, %v1754, 0
        %1823 = vmatprep.subr.bf16.mxu0 0
        %1824 = vmatpush1.bf16.msra.mxu0 0
        %1825 = vmatprep.subr.bf16.mxu0 0
        %1826 = vmatpush1.bf16.msra.mxu0 0
        %1827 = vmatprep.subr.bf16.mxu0 0
        %1828 = vmatpush1.bf16.msra.mxu0 0
        %1829 = vmatprep.subr.bf16.mxu0 0
        %1830 = vmatpush1.bf16.msra.mxu0 0
        %1831 = vmatprep.subr.bf16.mxu0 0
        %1832 = vmatpush1.bf16.msra.mxu0 0
        %1833 = vmatprep.subr.bf16.mxu0 0
        %1834 = vmatpush1.bf16.msra.mxu0 0
        %1835 = vmatprep.subr.bf16.mxu0 0
        %1836 = vmatpush1.bf16.msra.mxu0 0
        %1837 = vmatprep.subr.bf16.mxu0 0
        %1838 = vmatpush1.bf16.msra.mxu0 %v1818
        %1839 = vmatprep.subr.bf16.mxu0 0
        %1840 = vmatpush2.bf16.msra.mxu0 0
        %1841 = vmatprep.subr.bf16.mxu0 0
        %1842 = vmatpush2.bf16.msra.mxu0 0
        %1843 = vmatprep.subr.bf16.mxu0 0
        %1844 = vmatpush2.bf16.msra.mxu0 0
        %1845 = vmatprep.subr.bf16.mxu0 0
        %1846 = vmatpush2.bf16.msra.mxu0 0
        %1847 = vmatprep.subr.bf16.mxu0 0
        %1848 = vmatpush2.bf16.msra.mxu0 0
        %1849 = vmatprep.subr.bf16.mxu0 0
        %1850 = vmatpush2.bf16.msra.mxu0 0
        %1851 = vmatprep.subr.bf16.mxu0 0
        %1852 = vmatpush2.bf16.msra.mxu0 0
        %1853 = vmatprep.subr.bf16.mxu0 0
        %1854 = vmatpush2.bf16.msra.mxu0 0
        %1855 = vmatprep.mubr.bf16.mxu0 0
        %1856 = vmatmul.mubr.bf16.gmra.mxu0 %v1821
        %v1857 = vpop.f32.mrf.mxu0
        %v1858 = vadd.f32 %v1809, %v1857
        %v1859 = vpop.f32.mrf.mxu0
        %v1860 = vpop.f32.mrf.mxu0
        %v1861 = vpop.f32.mrf.mxu0
        %1862 = vdwg.mxu0
        %s1863 = scalar_lea.vmem [#allocation2], 4
        %v1864 = vld [vmem:[%s1863] ss:$8 sm:$0xf]
        %v1865 = vld [vmem:[%s1863] ss:$8 sm:$0xf0]
        %v1866 = vor.u32 %v1864, %v1865
        %v1867 = vpack.c.bf16 %v1866, %v1866
        %s1868 = scalar_lea.vmem %s5, 16
        %v1869 = vld [vmem:[%s1868] sm:$0xf]
        %v1870 = vld [vmem:[%s1868 + $0x4] sm:$0xf]
        %v1873 = vunpack.c.l.b16 %v1869
        %v1874 = vunpack.c.l.b16 %v1870
        %v1875 = vpack.c.b16 %v1874, %v1873
        %v1878 = vsel %vm1742, %v1867, 0
        %1880 = vmatprep.subr.bf16.mxu0 0
        %1881 = vmatpush1.bf16.msra.mxu0 0
        %1882 = vmatprep.subr.bf16.mxu0 0
        %1883 = vmatpush1.bf16.msra.mxu0 0
        %1884 = vmatprep.subr.bf16.mxu0 0
        %1885 = vmatpush1.bf16.msra.mxu0 0
        %1886 = vmatprep.subr.bf16.mxu0 0
        %1887 = vmatpush1.bf16.msra.mxu0 0
        %1888 = vmatprep.subr.bf16.mxu0 0
        %1889 = vmatpush1.bf16.msra.mxu0 0
        %1890 = vmatprep.subr.bf16.mxu0 0
        %1891 = vmatpush1.bf16.msra.mxu0 0
        %1892 = vmatprep.subr.bf16.mxu0 0
        %1893 = vmatpush1.bf16.msra.mxu0 0
        %1894 = vmatprep.subr.bf16.mxu0 0
        %1895 = vmatpush1.bf16.msra.mxu0 %v1875
        %1896 = vmatprep.subr.bf16.mxu0 0
        %1897 = vmatpush2.bf16.msra.mxu0 0
        %1898 = vmatprep.subr.bf16.mxu0 0
        %1899 = vmatpush2.bf16.msra.mxu0 0
        %1900 = vmatprep.subr.bf16.mxu0 0
        %1901 = vmatpush2.bf16.msra.mxu0 0
        %1902 = vmatprep.subr.bf16.mxu0 0
        %1903 = vmatpush2.bf16.msra.mxu0 0
        %1904 = vmatprep.subr.bf16.mxu0 0
        %1905 = vmatpush2.bf16.msra.mxu0 0
        %1906 = vmatprep.subr.bf16.mxu0 0
        %1907 = vmatpush2.bf16.msra.mxu0 0
        %1908 = vmatprep.subr.bf16.mxu0 0
        %1909 = vmatpush2.bf16.msra.mxu0 0
        %1910 = vmatprep.subr.bf16.mxu0 0
        %1911 = vmatpush2.bf16.msra.mxu0 0
        %1912 = vmatprep.mubr.bf16.mxu0 0
        %1913 = vmatmul.mubr.bf16.gmra.mxu0 %v1878
        %v1914 = vpop.f32.mrf.mxu0
        %v1915 = vadd.f32 0.0, %v1914
        %v1916 = vpop.f32.mrf.mxu0
        %v1917 = vpop.f32.mrf.mxu0
        %v1918 = vpop.f32.mrf.mxu0
        %1919 = vdwg.mxu0
        %v1920 = vadd.f32 %v1858, %v1915
        %s1921 = scalar_lea.vmem [#allocation2], 6
        %v1922 = vld [vmem:[%s1921] ss:$8 sm:$0xf]
        %v1923 = vld [vmem:[%s1921] ss:$8 sm:$0xf0]
        %v1924 = vor.u32 %v1922, %v1923
        %v1925 = vpack.c.bf16 %v1924, %v1924
        %s1926 = scalar_lea.vmem %s5, 24
        %v1927 = vld [vmem:[%s1926] sm:$0xf]
        %v1928 = vld [vmem:[%s1926 + $0x4] sm:$0xf]
        %v1931 = vunpack.c.l.b16 %v1927
        %v1932 = vunpack.c.l.b16 %v1928
        %v1933 = vpack.c.b16 %v1932, %v1931
        %v1936 = vsel %vm1742, %v1925, 0
        %1938 = vmatprep.subr.bf16.mxu0 0
        %1939 = vmatpush1.bf16.msra.mxu0 0
        %1940 = vmatprep.subr.bf16.mxu0 0
        %1941 = vmatpush1.bf16.msra.mxu0 0
        %1942 = vmatprep.subr.bf16.mxu0 0
        %1943 = vmatpush1.bf16.msra.mxu0 0
        %1944 = vmatprep.subr.bf16.mxu0 0
        %1945 = vmatpush1.bf16.msra.mxu0 0
        %1946 = vmatprep.subr.bf16.mxu0 0
        %1947 = vmatpush1.bf16.msra.mxu0 0
        %1948 = vmatprep.subr.bf16.mxu0 0
        %1949 = vmatpush1.bf16.msra.mxu0 0
        %1950 = vmatprep.subr.bf16.mxu0 0
        %1951 = vmatpush1.bf16.msra.mxu0 0
        %1952 = vmatprep.subr.bf16.mxu0 0
        %1953 = vmatpush1.bf16.msra.mxu0 %v1933
        %1954 = vmatprep.subr.bf16.mxu0 0
        %1955 = vmatpush2.bf16.msra.mxu0 0
        %1956 = vmatprep.subr.bf16.mxu0 0
        %1957 = vmatpush2.bf16.msra.mxu0 0
        %1958 = vmatprep.subr.bf16.mxu0 0
        %1959 = vmatpush2.bf16.msra.mxu0 0
        %1960 = vmatprep.subr.bf16.mxu0 0
        %1961 = vmatpush2.bf16.msra.mxu0 0
        %1962 = vmatprep.subr.bf16.mxu0 0
        %1963 = vmatpush2.bf16.msra.mxu0 0
        %1964 = vmatprep.subr.bf16.mxu0 0
        %1965 = vmatpush2.bf16.msra.mxu0 0
        %1966 = vmatprep.subr.bf16.mxu0 0
        %1967 = vmatpush2.bf16.msra.mxu0 0
        %1968 = vmatprep.subr.bf16.mxu0 0
        %1969 = vmatpush2.bf16.msra.mxu0 0
        %1970 = vmatprep.mubr.bf16.mxu0 0
        %1971 = vmatmul.mubr.bf16.gmra.mxu0 %v1936
        %v1972 = vpop.f32.mrf.mxu0
        %v1973 = vadd.f32 0.0, %v1972
        %v1974 = vpop.f32.mrf.mxu0
        %v1975 = vpop.f32.mrf.mxu0
        %v1976 = vpop.f32.mrf.mxu0
        %1977 = vdwg.mxu0
        %v1978 = vadd.f32 %v1920, %v1973
        %v1979 = vld [vmem:[%s6] sm:$0x1]
        %v1981 = vlaneseq
        %v1982 = vshrl.u32 %v1981, 7
        %v1983 = vsub.s32 0, %v1982
        %v1984 = vrot.slane %v1979, %v1983
        %v1986 = vadd.f32 %v1978, %v1984
        %vm1987 = vcmask 261120
        %1988 = vst.msk [vmem:[%s272] sm:$0xff] %vm1987, %v1986
        %s1989 = sand.u32 %s181, 1
        %s1990 = scalar_lea.sflag [#allocation4], %s1989
        %s1991 = sand.u32 %s181, 1
        %s1992 = smul.addr %s1991, 8
        %s1993 = scalar_lea.vmem [#allocation3], %s1992
        // Predicated region
        $region49: #{ae_encoder_fwd.1} parent=47 // pred_check
          %p1994 = pneg %p191
        $region50: #{ae_encoder_fwd.1} parent=47 // pred_check_branch
          %1996 = sbr.rel (%p1994) target = $region52
        $region51: #{ae_encoder_fwd.1} parent=47 // pred_region
          %s1998 = ssub.s32 128, 128
          %1999 = vsyncadd %s1990, %s1998
          %s2000 = smul.addr %s21, 128
          %s2001 = scalar_lea.hbm %s7, %s2000
          %s2003 = sshll.u32 %s1993, 4
          %s2004 = int_to_ptr.vmem [resolvable:$true] %s2003
          %2006 = dma.vmem_to_hbm [thread:$0]  %s2004, 128, %s2001, %s1990
        $region52: #{ae_encoder_fwd.1} parent=47 // pred_fallthru
          _
      $region48: #{ae_encoder_fwd.1} parent=5 // pred_fallthru
        _
      %p2007 = scmp.le.s32.totalorder 2, %s16
      // Predicated region
      $region53: #{ae_encoder_fwd.1} parent=5 // pred_check
        %p2008 = pneg %p2007
      $region54: #{ae_encoder_fwd.1} parent=5 // pred_check_branch
        %2010 = sbr.rel (%p2008) target = $region56
      $region55: #{ae_encoder_fwd.1} parent=5 // pred_region
        %s2011 = ssub.s32 %s16, 2
        // Predicated region
        $region57: #{ae_encoder_fwd.1} parent=55 // pred_check
          %p2012 = pneg %p197
        $region58: #{ae_encoder_fwd.1} parent=55 // pred_check_branch
          %2014 = sbr.rel (%p2012) target = $region60
        $region59: #{ae_encoder_fwd.1} parent=55 // pred_region
          %s2015 = sand.u32 %s182, 1
          %s2016 = scalar_lea.sflag [#allocation4], %s2015
          %s2017 = sand.u32 %s182, 1
          %s2018 = smul.addr %s2017, 8
          %s2019 = scalar_lea.vmem [#allocation3], %s2018
          %2020 = dma.done %s2016, 128
        $region60: #{ae_encoder_fwd.1} parent=55 // pred_fallthru
          _
      $region56: #{ae_encoder_fwd.1} parent=5 // pred_fallthru
        _
    $region6: #{ae_encoder_fwd.1} parent=1 // loop_footer
      %s20 = sadd.s32 1, %s16
    $region7: #{ae_encoder_fwd.1} parent=1 // loop_footer_branch
      %15 = sbr.rel target = $region3
    $region8: #{ae_encoder_fwd.1} parent=1 // loop_exit
      _
    %2021 = vsyncpa [#allocation4], 1
    %s2022 = scalar_lea.sflag [#allocation4], 1
    %2023 = vsyncpa %s2022, 1

</llo_original>
